<compile_context>
chip_gen: v7x
topology: tpu7x:2x2x1
jax: 0.10.0
libtpu: 0.0.40
codegen_flags: <defaults>
</compile_context>

<pallas_src>
import jax
import jax.numpy as jnp
from jax.experimental import pallas as pl
from jax.experimental.pallas import tpu as pltpu

# ----------------------- model hyper-parameters (small) -----------------------
B = 2          # sentences (batch)
T = 8          # sequence length
E = 32         # embedding_dim
H = 32         # hidden_dim
O = 4          # output_dim
N_LAYERS = 3


# ------------------------------ fused Pallas kernel ----------------------------
def fused_rnn_kernel(x_ref,
                     wih0_ref, whh0_ref, b0_ref,
                     wih1_ref, whh1_ref, b1_ref,
                     wih2_ref, whh2_ref, b2_ref,
                     wfc_ref, bfc_ref,
                     out_ref):
    """Entire forward pass in one kernel.

    x_ref:   (T*B, E)  f32  time-major flat input, row index = t*B + b
    wih*:    (F_l, 2H) bf16 per-layer input weights, [fwd | rev] column-stack
    whh*:    (2H, 2H)  bf16 per-layer block-diagonal recurrent weights
    b*:      (1, 2H)   f32  per-layer bias (b_ih + b_hh folded), [fwd | rev]
    wfc/bfc: (2H, O) bf16 / (1, O) f32 classifier head
    out_ref: (B, O)    f32  softmax probabilities
    """
    layers = ((wih0_ref, whh0_ref, b0_ref),
              (wih1_ref, whh1_ref, b1_ref),
              (wih2_ref, whh2_ref, b2_ref))

    # Lane mask selecting the forward-direction half ([:H]) of a (.., 2H) row.
    fwd_mask = jax.lax.broadcasted_iota(jnp.int32, (1, 2 * H), 1) < H

    h_in = x_ref[...]                                    # (T*B, F) f32, time-major
    acc = jnp.zeros((B, 2 * H), jnp.float32)             # time-sum of last layer
    for li, (wih_ref, whh_ref, b_ref) in enumerate(layers):
        is_last = li == N_LAYERS - 1

        # Hoisted input projection (+ folded bias) for all T steps & both
        # directions: one (T*B, F) @ (F, 2H) bf16 matmul off the serial chain.
        xproj = (jnp.dot(h_in.astype(jnp.bfloat16), wih_ref[...],
                         preferred_element_type=jnp.float32)
                 + b_ref[...])                           # (T*B, 2H) f32

        # Hoisted direction interleave (also off the serial chain):
        # inps[s] = [x_fwd(t=s) | x_rev(t=T-1-s)], consumed by unrolled step s.
        inps = [jnp.where(fwd_mask,
                          xproj[s * B:(s + 1) * B, :],
                          xproj[(T - 1 - s) * B:(T - s) * B, :])
                for s in range(T)]

        whh = whh_ref[...]                               # (2H, 2H) bf16 block-diag
        h = jnp.zeros((B, 2 * H), jnp.float32)           # [fwd | rev] hidden (vregs)
        hs = []
        for s in range(T):                               # fully unrolled time loop
            h = jnp.tanh(inps[s] +
                         jnp.dot(h.astype(jnp.bfloat16), whh,
                                 preferred_element_type=jnp.float32))
            if is_last:
                acc = acc + h                            # in-loop mean accumulation
            else:
                hs.append(h)

        if not is_last:
            # Next layer input assembled as a value (no VMEM round-trip):
            # row block t = [h_fwd[t] | h_rev[t]].
            h_in = jnp.concatenate(
                [jnp.where(fwd_mask, hs[t], hs[T - 1 - t]) for t in range(T)],
                axis=0)                                  # (T*B, 2H) f32

    # Fused head: mean over time -> Linear(2H, O) -> Softmax(dim=1).
    # Summing hs over step index is a permutation of summing over time for the
    # reverse half, so `acc` equals the time-sum of [fwd[t] | rev[t]].
    m = acc * (1.0 / T)                                  # (B, 2H)
    logits = (jnp.dot(m.astype(jnp.bfloat16), wfc_ref[...],
                      preferred_element_type=jnp.float32)
              + bfc_ref[...])                            # (B, O)
    z = logits - jnp.max(logits, axis=-1, keepdims=True)
    e = jnp.exp(z)
    out_ref[...] = e * pl.reciprocal(jnp.sum(e, axis=-1, keepdims=True),
                                     approx=True)


# ------------------------------ wrapper / glue ---------------------------------
def _stack_direction_weights(layer_params):
    """Stack fwd/rev weights: W_ih -> (F, 2H) column-stack, W_hh -> (2H, 2H)
    block-diagonal, bias -> (1, 2H). Matmul weights are cast to bf16 (MXU)."""
    (wih_f, whh_f, b_f), (wih_r, whh_r, b_r) = layer_params
    wih = jnp.concatenate([wih_f, wih_r], axis=1).astype(jnp.bfloat16)
    zeros = jnp.zeros((H, H), jnp.float32)
    whh = jnp.concatenate(
        [jnp.concatenate([whh_f, zeros], axis=1),
         jnp.concatenate([zeros, whh_r], axis=1)], axis=0).astype(jnp.bfloat16)
    b = jnp.concatenate([b_f, b_r], axis=1)
    return wih, whh, b


@jax.jit
def rnn_forward(x_bte, params):
    """Full forward pass: one fused Pallas kernel."""
    # time-major flat layout: row index = t*B + b
    x_flat = jnp.transpose(x_bte, (1, 0, 2)).reshape(T * B, E)

    inputs = [x_flat]
    for layer_params in params["rnn"]:
        inputs.extend(_stack_direction_weights(layer_params))
    w_fc, b_fc = params["fc"]
    inputs.extend([w_fc.astype(jnp.bfloat16), b_fc])

    probs = pl.pallas_call(
        fused_rnn_kernel,
        out_shape=jax.ShapeDtypeStruct((B, O), jnp.float32),
        in_specs=[pl.BlockSpec(memory_space=pltpu.MemorySpace.VMEM)] * len(inputs),
        out_specs=pl.BlockSpec(memory_space=pltpu.MemorySpace.VMEM),
    )(*inputs)
    # TODO(synk): for real batched workloads (B >> 2) add a leading "parallel"
    #             batch grid axis so v7x's second TensorCore is engaged; at
    #             B=2 it would only add per-step grid overhead.
    return probs[:, None, :]                             # (B, 1, O)


# ---------------------------- parameter construction ---------------------------
def init_params(key):
    """Mimics RNN.init_weights: rnn weights ~ N(0, 0.01), rnn biases 0,
    fc weight Xavier-uniform, fc bias 0. b = b_ih + b_hh folded into one row."""
    params = {"rnn": []}
    for l in range(N_LAYERS):
        in_dim = E if l == 0 else 2 * H
        dirs = []
        for _ in range(2):                               # forward, reverse
            key, k1, k2 = jax.random.split(key, 3)
            wih = 0.01 * jax.random.normal(k1, (in_dim, H), jnp.float32)
            whh = 0.01 * jax.random.normal(k2, (H, H), jnp.float32)
            b = jnp.zeros((1, H), jnp.float32)
            dirs.append((wih, whh, b))
        params["rnn"].append(dirs)
    key, kf = jax.random.split(key)
    bound = (6.0 / (2 * H + O)) ** 0.5
    w_fc = jax.random.uniform(kf, (2 * H, O), jnp.float32, -bound, bound)
    b_fc = jnp.zeros((1, O), jnp.float32)
    params["fc"] = (w_fc, b_fc)
    return params


# ------------------------------ pure-JAX reference -----------------------------
def _rnn_layer_ref(x_tbf, wih, whh, b, reverse):
    xs = x_tbf[::-1] if reverse else x_tbf
    h0 = jnp.zeros((x_tbf.shape[1], whh.shape[0]), jnp.float32)

    def step(hprev, xt):
        hnew = jnp.tanh(xt @ wih + hprev @ whh + b)
        return hnew, hnew

    _, ys = jax.lax.scan(step, h0, xs)
    return ys[::-1] if reverse else ys


def rnn_forward_ref(x_bte, params):
    x = jnp.transpose(x_bte, (1, 0, 2))
    h = x
    for layer_params in params["rnn"]:
        outs = [_rnn_layer_ref(h, w, u, b, d == 1)
                for d, (w, u, b) in enumerate(layer_params)]
        h = jnp.concatenate(outs, axis=-1)
    w_fc, b_fc = params["fc"]
    m = jnp.mean(h, axis=0)
    logits = m @ w_fc + b_fc
    return jax.nn.softmax(logits, axis=-1)[:, None, :]


# ------------------------------------ main --------------------------------------
if __name__ == "__main__":
    key = jax.random.PRNGKey(0)
    key, kx, kp = jax.random.split(key, 3)

    # Pre-embedded sentences: (batch, seq, embedding_dim)
    x = jax.random.normal(kx, (B, T, E), jnp.float32)
    params = init_params(kp)

    out = jax.block_until_ready(rnn_forward(x, params))
    ref = jax.block_until_ready(rnn_forward_ref(x, params))

    assert out.shape == (B, 1, O), out.shape
    # bf16 MXU operands + approx reciprocal => slightly looser tolerance vs f32 ref.
    assert jnp.allclose(out, ref, atol=2e-3, rtol=2e-2), (out, ref)
    assert jnp.allclose(jnp.sum(out, axis=-1), 1.0, atol=1e-2)  # softmax rows

    print("KERNEL_OK")
</pallas_src>

<mosaic_0001>
module attributes {stable_mosaic.version = 11 : i64} {
  func.func @fused_rnn_kernel(%arg0: memref<16x32xf32, #tpu.memory_space<vmem>>, %arg1: memref<32x64xbf16, #tpu.memory_space<vmem>>, %arg2: memref<64x64xbf16, #tpu.memory_space<vmem>>, %arg3: memref<1x64xf32, #tpu.memory_space<vmem>>, %arg4: memref<64x64xbf16, #tpu.memory_space<vmem>>, %arg5: memref<64x64xbf16, #tpu.memory_space<vmem>>, %arg6: memref<1x64xf32, #tpu.memory_space<vmem>>, %arg7: memref<64x64xbf16, #tpu.memory_space<vmem>>, %arg8: memref<64x64xbf16, #tpu.memory_space<vmem>>, %arg9: memref<1x64xf32, #tpu.memory_space<vmem>>, %arg10: memref<64x4xbf16, #tpu.memory_space<vmem>>, %arg11: memref<1x4xf32, #tpu.memory_space<vmem>>, %arg12: memref<2x4xf32, #tpu.memory_space<vmem>>) attributes {dimension_semantics = [], scalar_prefetch = 0 : i64, scratch_operands = 0 : i64, tpu.core_type = #tpu.core_type<tc>} {
    %0 = tpu.iota {dimensions = array<i32: 1>} : vector<1x64xi32>
    %c32_i32 = arith.constant 32 : i32
    %1 = vector.broadcast %c32_i32 : i32 to vector<1x64xi32>
    %2 = arith.cmpi slt, %0, %1 : vector<1x64xi32>
    %c0 = arith.constant 0 : index
    %c0_0 = arith.constant 0 : index
    %3 = vector.load %arg0[%c0, %c0_0] : memref<16x32xf32, #tpu.memory_space<vmem>>, vector<16x32xf32>
    %cst = arith.constant 0.000000e+00 : f32
    %4 = vector.broadcast %cst : f32 to vector<2x64xf32>
    %5 = arith.truncf %3 : vector<16x32xf32> to vector<16x32xbf16>
    %c0_1 = arith.constant 0 : index
    %c0_2 = arith.constant 0 : index
    %6 = vector.load %arg1[%c0_1, %c0_2] : memref<32x64xbf16, #tpu.memory_space<vmem>>, vector<32x64xbf16>
    %cst_3 = arith.constant dense<0.000000e+00> : vector<16x64xf32>
    %7 = tpu.matmul %5, %6, %cst_3 {dimension_numbers = #tpu.dot_dimension_numbers<[1], [0], [0], [1], [0, 0, 1, 1], [], []>} : vector<16x32xbf16>, vector<32x64xbf16>, vector<16x64xf32> -> vector<16x64xf32>
    %c0_4 = arith.constant 0 : index
    %c0_5 = arith.constant 0 : index
    %8 = vector.load %arg3[%c0_4, %c0_5] : memref<1x64xf32, #tpu.memory_space<vmem>>, vector<1x64xf32>
    %9 = vector.broadcast %8 : vector<1x64xf32> to vector<16x64xf32>
    %10 = arith.addf %7, %9 : vector<16x64xf32>
    %11 = vector.extract_strided_slice %10 {offsets = [0, 0], sizes = [2, 64], strides = [1, 1]} : vector<16x64xf32> to vector<2x64xf32>
    %12 = vector.extract_strided_slice %10 {offsets = [14, 0], sizes = [2, 64], strides = [1, 1]} : vector<16x64xf32> to vector<2x64xf32>
    %13 = vector.shape_cast %2 : vector<1x64xi1> to vector<1x64xi1>
    %14 = vector.broadcast %13 : vector<1x64xi1> to vector<2x64xi1>
    %15 = arith.select %14, %11, %12 : vector<2x64xi1>, vector<2x64xf32>
    %16 = vector.extract_strided_slice %10 {offsets = [2, 0], sizes = [2, 64], strides = [1, 1]} : vector<16x64xf32> to vector<2x64xf32>
    %17 = vector.extract_strided_slice %10 {offsets = [12, 0], sizes = [2, 64], strides = [1, 1]} : vector<16x64xf32> to vector<2x64xf32>
    %18 = vector.shape_cast %2 : vector<1x64xi1> to vector<1x64xi1>
    %19 = vector.broadcast %18 : vector<1x64xi1> to vector<2x64xi1>
    %20 = arith.select %19, %16, %17 : vector<2x64xi1>, vector<2x64xf32>
    %21 = vector.extract_strided_slice %10 {offsets = [4, 0], sizes = [2, 64], strides = [1, 1]} : vector<16x64xf32> to vector<2x64xf32>
    %22 = vector.extract_strided_slice %10 {offsets = [10, 0], sizes = [2, 64], strides = [1, 1]} : vector<16x64xf32> to vector<2x64xf32>
    %23 = vector.shape_cast %2 : vector<1x64xi1> to vector<1x64xi1>
    %24 = vector.broadcast %23 : vector<1x64xi1> to vector<2x64xi1>
    %25 = arith.select %24, %21, %22 : vector<2x64xi1>, vector<2x64xf32>
    %26 = vector.extract_strided_slice %10 {offsets = [6, 0], sizes = [2, 64], strides = [1, 1]} : vector<16x64xf32> to vector<2x64xf32>
    %27 = vector.extract_strided_slice %10 {offsets = [8, 0], sizes = [2, 64], strides = [1, 1]} : vector<16x64xf32> to vector<2x64xf32>
    %28 = vector.shape_cast %2 : vector<1x64xi1> to vector<1x64xi1>
    %29 = vector.broadcast %28 : vector<1x64xi1> to vector<2x64xi1>
    %30 = arith.select %29, %26, %27 : vector<2x64xi1>, vector<2x64xf32>
    %31 = vector.extract_strided_slice %10 {offsets = [8, 0], sizes = [2, 64], strides = [1, 1]} : vector<16x64xf32> to vector<2x64xf32>
    %32 = vector.extract_strided_slice %10 {offsets = [6, 0], sizes = [2, 64], strides = [1, 1]} : vector<16x64xf32> to vector<2x64xf32>
    %33 = vector.shape_cast %2 : vector<1x64xi1> to vector<1x64xi1>
    %34 = vector.broadcast %33 : vector<1x64xi1> to vector<2x64xi1>
    %35 = arith.select %34, %31, %32 : vector<2x64xi1>, vector<2x64xf32>
    %36 = vector.extract_strided_slice %10 {offsets = [10, 0], sizes = [2, 64], strides = [1, 1]} : vector<16x64xf32> to vector<2x64xf32>
    %37 = vector.extract_strided_slice %10 {offsets = [4, 0], sizes = [2, 64], strides = [1, 1]} : vector<16x64xf32> to vector<2x64xf32>
    %38 = vector.shape_cast %2 : vector<1x64xi1> to vector<1x64xi1>
    %39 = vector.broadcast %38 : vector<1x64xi1> to vector<2x64xi1>
    %40 = arith.select %39, %36, %37 : vector<2x64xi1>, vector<2x64xf32>
    %41 = vector.extract_strided_slice %10 {offsets = [12, 0], sizes = [2, 64], strides = [1, 1]} : vector<16x64xf32> to vector<2x64xf32>
    %42 = vector.extract_strided_slice %10 {offsets = [2, 0], sizes = [2, 64], strides = [1, 1]} : vector<16x64xf32> to vector<2x64xf32>
    %43 = vector.shape_cast %2 : vector<1x64xi1> to vector<1x64xi1>
    %44 = vector.broadcast %43 : vector<1x64xi1> to vector<2x64xi1>
    %45 = arith.select %44, %41, %42 : vector<2x64xi1>, vector<2x64xf32>
    %46 = vector.extract_strided_slice %10 {offsets = [14, 0], sizes = [2, 64], strides = [1, 1]} : vector<16x64xf32> to vector<2x64xf32>
    %47 = vector.extract_strided_slice %10 {offsets = [0, 0], sizes = [2, 64], strides = [1, 1]} : vector<16x64xf32> to vector<2x64xf32>
    %48 = vector.shape_cast %2 : vector<1x64xi1> to vector<1x64xi1>
    %49 = vector.broadcast %48 : vector<1x64xi1> to vector<2x64xi1>
    %50 = arith.select %49, %46, %47 : vector<2x64xi1>, vector<2x64xf32>
    %c0_6 = arith.constant 0 : index
    %c0_7 = arith.constant 0 : index
    %51 = vector.load %arg2[%c0_6, %c0_7] : memref<64x64xbf16, #tpu.memory_space<vmem>>, vector<64x64xbf16>
    %cst_8 = arith.constant 0.000000e+00 : f32
    %52 = vector.broadcast %cst_8 : f32 to vector<2x64xf32>
    %53 = arith.truncf %52 : vector<2x64xf32> to vector<2x64xbf16>
    %cst_9 = arith.constant dense<0.000000e+00> : vector<2x64xf32>
    %54 = tpu.matmul %53, %51, %cst_9 {dimension_numbers = #tpu.dot_dimension_numbers<[1], [0], [0], [1], [0, 0, 1, 1], [], []>} : vector<2x64xbf16>, vector<64x64xbf16>, vector<2x64xf32> -> vector<2x64xf32>
    %55 = arith.addf %15, %54 : vector<2x64xf32>
    %56 = math.tanh %55 : vector<2x64xf32>
    %57 = arith.truncf %56 : vector<2x64xf32> to vector<2x64xbf16>
    %cst_10 = arith.constant dense<0.000000e+00> : vector<2x64xf32>
    %58 = tpu.matmul %57, %51, %cst_10 {dimension_numbers = #tpu.dot_dimension_numbers<[1], [0], [0], [1], [0, 0, 1, 1], [], []>} : vector<2x64xbf16>, vector<64x64xbf16>, vector<2x64xf32> -> vector<2x64xf32>
    %59 = arith.addf %20, %58 : vector<2x64xf32>
    %60 = math.tanh %59 : vector<2x64xf32>
    %61 = arith.truncf %60 : vector<2x64xf32> to vector<2x64xbf16>
    %cst_11 = arith.constant dense<0.000000e+00> : vector<2x64xf32>
    %62 = tpu.matmul %61, %51, %cst_11 {dimension_numbers = #tpu.dot_dimension_numbers<[1], [0], [0], [1], [0, 0, 1, 1], [], []>} : vector<2x64xbf16>, vector<64x64xbf16>, vector<2x64xf32> -> vector<2x64xf32>
    %63 = arith.addf %25, %62 : vector<2x64xf32>
    %64 = math.tanh %63 : vector<2x64xf32>
    %65 = arith.truncf %64 : vector<2x64xf32> to vector<2x64xbf16>
    %cst_12 = arith.constant dense<0.000000e+00> : vector<2x64xf32>
    %66 = tpu.matmul %65, %51, %cst_12 {dimension_numbers = #tpu.dot_dimension_numbers<[1], [0], [0], [1], [0, 0, 1, 1], [], []>} : vector<2x64xbf16>, vector<64x64xbf16>, vector<2x64xf32> -> vector<2x64xf32>
    %67 = arith.addf %30, %66 : vector<2x64xf32>
    %68 = math.tanh %67 : vector<2x64xf32>
    %69 = arith.truncf %68 : vector<2x64xf32> to vector<2x64xbf16>
    %cst_13 = arith.constant dense<0.000000e+00> : vector<2x64xf32>
    %70 = tpu.matmul %69, %51, %cst_13 {dimension_numbers = #tpu.dot_dimension_numbers<[1], [0], [0], [1], [0, 0, 1, 1], [], []>} : vector<2x64xbf16>, vector<64x64xbf16>, vector<2x64xf32> -> vector<2x64xf32>
    %71 = arith.addf %35, %70 : vector<2x64xf32>
    %72 = math.tanh %71 : vector<2x64xf32>
    %73 = arith.truncf %72 : vector<2x64xf32> to vector<2x64xbf16>
    %cst_14 = arith.constant dense<0.000000e+00> : vector<2x64xf32>
    %74 = tpu.matmul %73, %51, %cst_14 {dimension_numbers = #tpu.dot_dimension_numbers<[1], [0], [0], [1], [0, 0, 1, 1], [], []>} : vector<2x64xbf16>, vector<64x64xbf16>, vector<2x64xf32> -> vector<2x64xf32>
    %75 = arith.addf %40, %74 : vector<2x64xf32>
    %76 = math.tanh %75 : vector<2x64xf32>
    %77 = arith.truncf %76 : vector<2x64xf32> to vector<2x64xbf16>
    %cst_15 = arith.constant dense<0.000000e+00> : vector<2x64xf32>
    %78 = tpu.matmul %77, %51, %cst_15 {dimension_numbers = #tpu.dot_dimension_numbers<[1], [0], [0], [1], [0, 0, 1, 1], [], []>} : vector<2x64xbf16>, vector<64x64xbf16>, vector<2x64xf32> -> vector<2x64xf32>
    %79 = arith.addf %45, %78 : vector<2x64xf32>
    %80 = math.tanh %79 : vector<2x64xf32>
    %81 = arith.truncf %80 : vector<2x64xf32> to vector<2x64xbf16>
    %cst_16 = arith.constant dense<0.000000e+00> : vector<2x64xf32>
    %82 = tpu.matmul %81, %51, %cst_16 {dimension_numbers = #tpu.dot_dimension_numbers<[1], [0], [0], [1], [0, 0, 1, 1], [], []>} : vector<2x64xbf16>, vector<64x64xbf16>, vector<2x64xf32> -> vector<2x64xf32>
    %83 = arith.addf %50, %82 : vector<2x64xf32>
    %84 = math.tanh %83 : vector<2x64xf32>
    %85 = vector.shape_cast %2 : vector<1x64xi1> to vector<1x64xi1>
    %86 = vector.broadcast %85 : vector<1x64xi1> to vector<2x64xi1>
    %87 = arith.select %86, %56, %84 : vector<2x64xi1>, vector<2x64xf32>
    %88 = vector.shape_cast %2 : vector<1x64xi1> to vector<1x64xi1>
    %89 = vector.broadcast %88 : vector<1x64xi1> to vector<2x64xi1>
    %90 = arith.select %89, %60, %80 : vector<2x64xi1>, vector<2x64xf32>
    %91 = vector.shape_cast %2 : vector<1x64xi1> to vector<1x64xi1>
    %92 = vector.broadcast %91 : vector<1x64xi1> to vector<2x64xi1>
    %93 = arith.select %92, %64, %76 : vector<2x64xi1>, vector<2x64xf32>
    %94 = vector.shape_cast %2 : vector<1x64xi1> to vector<1x64xi1>
    %95 = vector.broadcast %94 : vector<1x64xi1> to vector<2x64xi1>
    %96 = arith.select %95, %68, %72 : vector<2x64xi1>, vector<2x64xf32>
    %97 = vector.shape_cast %2 : vector<1x64xi1> to vector<1x64xi1>
    %98 = vector.broadcast %97 : vector<1x64xi1> to vector<2x64xi1>
    %99 = arith.select %98, %72, %68 : vector<2x64xi1>, vector<2x64xf32>
    %100 = vector.shape_cast %2 : vector<1x64xi1> to vector<1x64xi1>
    %101 = vector.broadcast %100 : vector<1x64xi1> to vector<2x64xi1>
    %102 = arith.select %101, %76, %64 : vector<2x64xi1>, vector<2x64xf32>
    %103 = vector.shape_cast %2 : vector<1x64xi1> to vector<1x64xi1>
    %104 = vector.broadcast %103 : vector<1x64xi1> to vector<2x64xi1>
    %105 = arith.select %104, %80, %60 : vector<2x64xi1>, vector<2x64xf32>
    %106 = vector.shape_cast %2 : vector<1x64xi1> to vector<1x64xi1>
    %107 = vector.broadcast %106 : vector<1x64xi1> to vector<2x64xi1>
    %108 = arith.select %107, %84, %56 : vector<2x64xi1>, vector<2x64xf32>
    %109 = tpu.concatenate %87, %90, %93, %96, %99, %102, %105, %108 in 0 : vector<2x64xf32>, vector<2x64xf32>, vector<2x64xf32>, vector<2x64xf32>, vector<2x64xf32>, vector<2x64xf32>, vector<2x64xf32>, vector<2x64xf32> -> vector<16x64xf32>
    %110 = arith.truncf %109 : vector<16x64xf32> to vector<16x64xbf16>
    %c0_17 = arith.constant 0 : index
    %c0_18 = arith.constant 0 : index
    %111 = vector.load %arg4[%c0_17, %c0_18] : memref<64x64xbf16, #tpu.memory_space<vmem>>, vector<64x64xbf16>
    %cst_19 = arith.constant dense<0.000000e+00> : vector<16x64xf32>
    %112 = tpu.matmul %110, %111, %cst_19 {dimension_numbers = #tpu.dot_dimension_numbers<[1], [0], [0], [1], [0, 0, 1, 1], [], []>} : vector<16x64xbf16>, vector<64x64xbf16>, vector<16x64xf32> -> vector<16x64xf32>
    %c0_20 = arith.constant 0 : index
    %c0_21 = arith.constant 0 : index
    %113 = vector.load %arg6[%c0_20, %c0_21] : memref<1x64xf32, #tpu.memory_space<vmem>>, vector<1x64xf32>
    %114 = vector.broadcast %113 : vector<1x64xf32> to vector<16x64xf32>
    %115 = arith.addf %112, %114 : vector<16x64xf32>
    %116 = vector.extract_strided_slice %115 {offsets = [0, 0], sizes = [2, 64], strides = [1, 1]} : vector<16x64xf32> to vector<2x64xf32>
    %117 = vector.extract_strided_slice %115 {offsets = [14, 0], sizes = [2, 64], strides = [1, 1]} : vector<16x64xf32> to vector<2x64xf32>
    %118 = vector.shape_cast %2 : vector<1x64xi1> to vector<1x64xi1>
    %119 = vector.broadcast %118 : vector<1x64xi1> to vector<2x64xi1>
    %120 = arith.select %119, %116, %117 : vector<2x64xi1>, vector<2x64xf32>
    %121 = vector.extract_strided_slice %115 {offsets = [2, 0], sizes = [2, 64], strides = [1, 1]} : vector<16x64xf32> to vector<2x64xf32>
    %122 = vector.extract_strided_slice %115 {offsets = [12, 0], sizes = [2, 64], strides = [1, 1]} : vector<16x64xf32> to vector<2x64xf32>
    %123 = vector.shape_cast %2 : vector<1x64xi1> to vector<1x64xi1>
    %124 = vector.broadcast %123 : vector<1x64xi1> to vector<2x64xi1>
    %125 = arith.select %124, %121, %122 : vector<2x64xi1>, vector<2x64xf32>
    %126 = vector.extract_strided_slice %115 {offsets = [4, 0], sizes = [2, 64], strides = [1, 1]} : vector<16x64xf32> to vector<2x64xf32>
    %127 = vector.extract_strided_slice %115 {offsets = [10, 0], sizes = [2, 64], strides = [1, 1]} : vector<16x64xf32> to vector<2x64xf32>
    %128 = vector.shape_cast %2 : vector<1x64xi1> to vector<1x64xi1>
    %129 = vector.broadcast %128 : vector<1x64xi1> to vector<2x64xi1>
    %130 = arith.select %129, %126, %127 : vector<2x64xi1>, vector<2x64xf32>
    %131 = vector.extract_strided_slice %115 {offsets = [6, 0], sizes = [2, 64], strides = [1, 1]} : vector<16x64xf32> to vector<2x64xf32>
    %132 = vector.extract_strided_slice %115 {offsets = [8, 0], sizes = [2, 64], strides = [1, 1]} : vector<16x64xf32> to vector<2x64xf32>
    %133 = vector.shape_cast %2 : vector<1x64xi1> to vector<1x64xi1>
    %134 = vector.broadcast %133 : vector<1x64xi1> to vector<2x64xi1>
    %135 = arith.select %134, %131, %132 : vector<2x64xi1>, vector<2x64xf32>
    %136 = vector.extract_strided_slice %115 {offsets = [8, 0], sizes = [2, 64], strides = [1, 1]} : vector<16x64xf32> to vector<2x64xf32>
    %137 = vector.extract_strided_slice %115 {offsets = [6, 0], sizes = [2, 64], strides = [1, 1]} : vector<16x64xf32> to vector<2x64xf32>
    %138 = vector.shape_cast %2 : vector<1x64xi1> to vector<1x64xi1>
    %139 = vector.broadcast %138 : vector<1x64xi1> to vector<2x64xi1>
    %140 = arith.select %139, %136, %137 : vector<2x64xi1>, vector<2x64xf32>
    %141 = vector.extract_strided_slice %115 {offsets = [10, 0], sizes = [2, 64], strides = [1, 1]} : vector<16x64xf32> to vector<2x64xf32>
    %142 = vector.extract_strided_slice %115 {offsets = [4, 0], sizes = [2, 64], strides = [1, 1]} : vector<16x64xf32> to vector<2x64xf32>
    %143 = vector.shape_cast %2 : vector<1x64xi1> to vector<1x64xi1>
    %144 = vector.broadcast %143 : vector<1x64xi1> to vector<2x64xi1>
    %145 = arith.select %144, %141, %142 : vector<2x64xi1>, vector<2x64xf32>
    %146 = vector.extract_strided_slice %115 {offsets = [12, 0], sizes = [2, 64], strides = [1, 1]} : vector<16x64xf32> to vector<2x64xf32>
    %147 = vector.extract_strided_slice %115 {offsets = [2, 0], sizes = [2, 64], strides = [1, 1]} : vector<16x64xf32> to vector<2x64xf32>
    %148 = vector.shape_cast %2 : vector<1x64xi1> to vector<1x64xi1>
    %149 = vector.broadcast %148 : vector<1x64xi1> to vector<2x64xi1>
    %150 = arith.select %149, %146, %147 : vector<2x64xi1>, vector<2x64xf32>
    %151 = vector.extract_strided_slice %115 {offsets = [14, 0], sizes = [2, 64], strides = [1, 1]} : vector<16x64xf32> to vector<2x64xf32>
    %152 = vector.extract_strided_slice %115 {offsets = [0, 0], sizes = [2, 64], strides = [1, 1]} : vector<16x64xf32> to vector<2x64xf32>
    %153 = vector.shape_cast %2 : vector<1x64xi1> to vector<1x64xi1>
    %154 = vector.broadcast %153 : vector<1x64xi1> to vector<2x64xi1>
    %155 = arith.select %154, %151, %152 : vector<2x64xi1>, vector<2x64xf32>
    %c0_22 = arith.constant 0 : index
    %c0_23 = arith.constant 0 : index
    %156 = vector.load %arg5[%c0_22, %c0_23] : memref<64x64xbf16, #tpu.memory_space<vmem>>, vector<64x64xbf16>
    %cst_24 = arith.constant 0.000000e+00 : f32
    %157 = vector.broadcast %cst_24 : f32 to vector<2x64xf32>
    %158 = arith.truncf %157 : vector<2x64xf32> to vector<2x64xbf16>
    %cst_25 = arith.constant dense<0.000000e+00> : vector<2x64xf32>
    %159 = tpu.matmul %158, %156, %cst_25 {dimension_numbers = #tpu.dot_dimension_numbers<[1], [0], [0], [1], [0, 0, 1, 1], [], []>} : vector<2x64xbf16>, vector<64x64xbf16>, vector<2x64xf32> -> vector<2x64xf32>
    %160 = arith.addf %120, %159 : vector<2x64xf32>
    %161 = math.tanh %160 : vector<2x64xf32>
    %162 = arith.truncf %161 : vector<2x64xf32> to vector<2x64xbf16>
    %cst_26 = arith.constant dense<0.000000e+00> : vector<2x64xf32>
    %163 = tpu.matmul %162, %156, %cst_26 {dimension_numbers = #tpu.dot_dimension_numbers<[1], [0], [0], [1], [0, 0, 1, 1], [], []>} : vector<2x64xbf16>, vector<64x64xbf16>, vector<2x64xf32> -> vector<2x64xf32>
    %164 = arith.addf %125, %163 : vector<2x64xf32>
    %165 = math.tanh %164 : vector<2x64xf32>
    %166 = arith.truncf %165 : vector<2x64xf32> to vector<2x64xbf16>
    %cst_27 = arith.constant dense<0.000000e+00> : vector<2x64xf32>
    %167 = tpu.matmul %166, %156, %cst_27 {dimension_numbers = #tpu.dot_dimension_numbers<[1], [0], [0], [1], [0, 0, 1, 1], [], []>} : vector<2x64xbf16>, vector<64x64xbf16>, vector<2x64xf32> -> vector<2x64xf32>
    %168 = arith.addf %130, %167 : vector<2x64xf32>
    %169 = math.tanh %168 : vector<2x64xf32>
    %170 = arith.truncf %169 : vector<2x64xf32> to vector<2x64xbf16>
    %cst_28 = arith.constant dense<0.000000e+00> : vector<2x64xf32>
    %171 = tpu.matmul %170, %156, %cst_28 {dimension_numbers = #tpu.dot_dimension_numbers<[1], [0], [0], [1], [0, 0, 1, 1], [], []>} : vector<2x64xbf16>, vector<64x64xbf16>, vector<2x64xf32> -> vector<2x64xf32>
    %172 = arith.addf %135, %171 : vector<2x64xf32>
    %173 = math.tanh %172 : vector<2x64xf32>
    %174 = arith.truncf %173 : vector<2x64xf32> to vector<2x64xbf16>
    %cst_29 = arith.constant dense<0.000000e+00> : vector<2x64xf32>
    %175 = tpu.matmul %174, %156, %cst_29 {dimension_numbers = #tpu.dot_dimension_numbers<[1], [0], [0], [1], [0, 0, 1, 1], [], []>} : vector<2x64xbf16>, vector<64x64xbf16>, vector<2x64xf32> -> vector<2x64xf32>
    %176 = arith.addf %140, %175 : vector<2x64xf32>
    %177 = math.tanh %176 : vector<2x64xf32>
    %178 = arith.truncf %177 : vector<2x64xf32> to vector<2x64xbf16>
    %cst_30 = arith.constant dense<0.000000e+00> : vector<2x64xf32>
    %179 = tpu.matmul %178, %156, %cst_30 {dimension_numbers = #tpu.dot_dimension_numbers<[1], [0], [0], [1], [0, 0, 1, 1], [], []>} : vector<2x64xbf16>, vector<64x64xbf16>, vector<2x64xf32> -> vector<2x64xf32>
    %180 = arith.addf %145, %179 : vector<2x64xf32>
    %181 = math.tanh %180 : vector<2x64xf32>
    %182 = arith.truncf %181 : vector<2x64xf32> to vector<2x64xbf16>
    %cst_31 = arith.constant dense<0.000000e+00> : vector<2x64xf32>
    %183 = tpu.matmul %182, %156, %cst_31 {dimension_numbers = #tpu.dot_dimension_numbers<[1], [0], [0], [1], [0, 0, 1, 1], [], []>} : vector<2x64xbf16>, vector<64x64xbf16>, vector<2x64xf32> -> vector<2x64xf32>
    %184 = arith.addf %150, %183 : vector<2x64xf32>
    %185 = math.tanh %184 : vector<2x64xf32>
    %186 = arith.truncf %185 : vector<2x64xf32> to vector<2x64xbf16>
    %cst_32 = arith.constant dense<0.000000e+00> : vector<2x64xf32>
    %187 = tpu.matmul %186, %156, %cst_32 {dimension_numbers = #tpu.dot_dimension_numbers<[1], [0], [0], [1], [0, 0, 1, 1], [], []>} : vector<2x64xbf16>, vector<64x64xbf16>, vector<2x64xf32> -> vector<2x64xf32>
    %188 = arith.addf %155, %187 : vector<2x64xf32>
    %189 = math.tanh %188 : vector<2x64xf32>
    %190 = vector.shape_cast %2 : vector<1x64xi1> to vector<1x64xi1>
    %191 = vector.broadcast %190 : vector<1x64xi1> to vector<2x64xi1>
    %192 = arith.select %191, %161, %189 : vector<2x64xi1>, vector<2x64xf32>
    %193 = vector.shape_cast %2 : vector<1x64xi1> to vector<1x64xi1>
    %194 = vector.broadcast %193 : vector<1x64xi1> to vector<2x64xi1>
    %195 = arith.select %194, %165, %185 : vector<2x64xi1>, vector<2x64xf32>
    %196 = vector.shape_cast %2 : vector<1x64xi1> to vector<1x64xi1>
    %197 = vector.broadcast %196 : vector<1x64xi1> to vector<2x64xi1>
    %198 = arith.select %197, %169, %181 : vector<2x64xi1>, vector<2x64xf32>
    %199 = vector.shape_cast %2 : vector<1x64xi1> to vector<1x64xi1>
    %200 = vector.broadcast %199 : vector<1x64xi1> to vector<2x64xi1>
    %201 = arith.select %200, %173, %177 : vector<2x64xi1>, vector<2x64xf32>
    %202 = vector.shape_cast %2 : vector<1x64xi1> to vector<1x64xi1>
    %203 = vector.broadcast %202 : vector<1x64xi1> to vector<2x64xi1>
    %204 = arith.select %203, %177, %173 : vector<2x64xi1>, vector<2x64xf32>
    %205 = vector.shape_cast %2 : vector<1x64xi1> to vector<1x64xi1>
    %206 = vector.broadcast %205 : vector<1x64xi1> to vector<2x64xi1>
    %207 = arith.select %206, %181, %169 : vector<2x64xi1>, vector<2x64xf32>
    %208 = vector.shape_cast %2 : vector<1x64xi1> to vector<1x64xi1>
    %209 = vector.broadcast %208 : vector<1x64xi1> to vector<2x64xi1>
    %210 = arith.select %209, %185, %165 : vector<2x64xi1>, vector<2x64xf32>
    %211 = vector.shape_cast %2 : vector<1x64xi1> to vector<1x64xi1>
    %212 = vector.broadcast %211 : vector<1x64xi1> to vector<2x64xi1>
    %213 = arith.select %212, %189, %161 : vector<2x64xi1>, vector<2x64xf32>
    %214 = tpu.concatenate %192, %195, %198, %201, %204, %207, %210, %213 in 0 : vector<2x64xf32>, vector<2x64xf32>, vector<2x64xf32>, vector<2x64xf32>, vector<2x64xf32>, vector<2x64xf32>, vector<2x64xf32>, vector<2x64xf32> -> vector<16x64xf32>
    %215 = arith.truncf %214 : vector<16x64xf32> to vector<16x64xbf16>
    %c0_33 = arith.constant 0 : index
    %c0_34 = arith.constant 0 : index
    %216 = vector.load %arg7[%c0_33, %c0_34] : memref<64x64xbf16, #tpu.memory_space<vmem>>, vector<64x64xbf16>
    %cst_35 = arith.constant dense<0.000000e+00> : vector<16x64xf32>
    %217 = tpu.matmul %215, %216, %cst_35 {dimension_numbers = #tpu.dot_dimension_numbers<[1], [0], [0], [1], [0, 0, 1, 1], [], []>} : vector<16x64xbf16>, vector<64x64xbf16>, vector<16x64xf32> -> vector<16x64xf32>
    %c0_36 = arith.constant 0 : index
    %c0_37 = arith.constant 0 : index
    %218 = vector.load %arg9[%c0_36, %c0_37] : memref<1x64xf32, #tpu.memory_space<vmem>>, vector<1x64xf32>
    %219 = vector.broadcast %218 : vector<1x64xf32> to vector<16x64xf32>
    %220 = arith.addf %217, %219 : vector<16x64xf32>
    %221 = vector.extract_strided_slice %220 {offsets = [0, 0], sizes = [2, 64], strides = [1, 1]} : vector<16x64xf32> to vector<2x64xf32>
    %222 = vector.extract_strided_slice %220 {offsets = [14, 0], sizes = [2, 64], strides = [1, 1]} : vector<16x64xf32> to vector<2x64xf32>
    %223 = vector.shape_cast %2 : vector<1x64xi1> to vector<1x64xi1>
    %224 = vector.broadcast %223 : vector<1x64xi1> to vector<2x64xi1>
    %225 = arith.select %224, %221, %222 : vector<2x64xi1>, vector<2x64xf32>
    %226 = vector.extract_strided_slice %220 {offsets = [2, 0], sizes = [2, 64], strides = [1, 1]} : vector<16x64xf32> to vector<2x64xf32>
    %227 = vector.extract_strided_slice %220 {offsets = [12, 0], sizes = [2, 64], strides = [1, 1]} : vector<16x64xf32> to vector<2x64xf32>
    %228 = vector.shape_cast %2 : vector<1x64xi1> to vector<1x64xi1>
    %229 = vector.broadcast %228 : vector<1x64xi1> to vector<2x64xi1>
    %230 = arith.select %229, %226, %227 : vector<2x64xi1>, vector<2x64xf32>
    %231 = vector.extract_strided_slice %220 {offsets = [4, 0], sizes = [2, 64], strides = [1, 1]} : vector<16x64xf32> to vector<2x64xf32>
    %232 = vector.extract_strided_slice %220 {offsets = [10, 0], sizes = [2, 64], strides = [1, 1]} : vector<16x64xf32> to vector<2x64xf32>
    %233 = vector.shape_cast %2 : vector<1x64xi1> to vector<1x64xi1>
    %234 = vector.broadcast %233 : vector<1x64xi1> to vector<2x64xi1>
    %235 = arith.select %234, %231, %232 : vector<2x64xi1>, vector<2x64xf32>
    %236 = vector.extract_strided_slice %220 {offsets = [6, 0], sizes = [2, 64], strides = [1, 1]} : vector<16x64xf32> to vector<2x64xf32>
    %237 = vector.extract_strided_slice %220 {offsets = [8, 0], sizes = [2, 64], strides = [1, 1]} : vector<16x64xf32> to vector<2x64xf32>
    %238 = vector.shape_cast %2 : vector<1x64xi1> to vector<1x64xi1>
    %239 = vector.broadcast %238 : vector<1x64xi1> to vector<2x64xi1>
    %240 = arith.select %239, %236, %237 : vector<2x64xi1>, vector<2x64xf32>
    %241 = vector.extract_strided_slice %220 {offsets = [8, 0], sizes = [2, 64], strides = [1, 1]} : vector<16x64xf32> to vector<2x64xf32>
    %242 = vector.extract_strided_slice %220 {offsets = [6, 0], sizes = [2, 64], strides = [1, 1]} : vector<16x64xf32> to vector<2x64xf32>
    %243 = vector.shape_cast %2 : vector<1x64xi1> to vector<1x64xi1>
    %244 = vector.broadcast %243 : vector<1x64xi1> to vector<2x64xi1>
    %245 = arith.select %244, %241, %242 : vector<2x64xi1>, vector<2x64xf32>
    %246 = vector.extract_strided_slice %220 {offsets = [10, 0], sizes = [2, 64], strides = [1, 1]} : vector<16x64xf32> to vector<2x64xf32>
    %247 = vector.extract_strided_slice %220 {offsets = [4, 0], sizes = [2, 64], strides = [1, 1]} : vector<16x64xf32> to vector<2x64xf32>
    %248 = vector.shape_cast %2 : vector<1x64xi1> to vector<1x64xi1>
    %249 = vector.broadcast %248 : vector<1x64xi1> to vector<2x64xi1>
    %250 = arith.select %249, %246, %247 : vector<2x64xi1>, vector<2x64xf32>
    %251 = vector.extract_strided_slice %220 {offsets = [12, 0], sizes = [2, 64], strides = [1, 1]} : vector<16x64xf32> to vector<2x64xf32>
    %252 = vector.extract_strided_slice %220 {offsets = [2, 0], sizes = [2, 64], strides = [1, 1]} : vector<16x64xf32> to vector<2x64xf32>
    %253 = vector.shape_cast %2 : vector<1x64xi1> to vector<1x64xi1>
    %254 = vector.broadcast %253 : vector<1x64xi1> to vector<2x64xi1>
    %255 = arith.select %254, %251, %252 : vector<2x64xi1>, vector<2x64xf32>
    %256 = vector.extract_strided_slice %220 {offsets = [14, 0], sizes = [2, 64], strides = [1, 1]} : vector<16x64xf32> to vector<2x64xf32>
    %257 = vector.extract_strided_slice %220 {offsets = [0, 0], sizes = [2, 64], strides = [1, 1]} : vector<16x64xf32> to vector<2x64xf32>
    %258 = vector.shape_cast %2 : vector<1x64xi1> to vector<1x64xi1>
    %259 = vector.broadcast %258 : vector<1x64xi1> to vector<2x64xi1>
    %260 = arith.select %259, %256, %257 : vector<2x64xi1>, vector<2x64xf32>
    %c0_38 = arith.constant 0 : index
    %c0_39 = arith.constant 0 : index
    %261 = vector.load %arg8[%c0_38, %c0_39] : memref<64x64xbf16, #tpu.memory_space<vmem>>, vector<64x64xbf16>
    %cst_40 = arith.constant 0.000000e+00 : f32
    %262 = vector.broadcast %cst_40 : f32 to vector<2x64xf32>
    %263 = arith.truncf %262 : vector<2x64xf32> to vector<2x64xbf16>
    %cst_41 = arith.constant dense<0.000000e+00> : vector<2x64xf32>
    %264 = tpu.matmul %263, %261, %cst_41 {dimension_numbers = #tpu.dot_dimension_numbers<[1], [0], [0], [1], [0, 0, 1, 1], [], []>} : vector<2x64xbf16>, vector<64x64xbf16>, vector<2x64xf32> -> vector<2x64xf32>
    %265 = arith.addf %225, %264 : vector<2x64xf32>
    %266 = math.tanh %265 : vector<2x64xf32>
    %267 = arith.addf %4, %266 : vector<2x64xf32>
    %268 = arith.truncf %266 : vector<2x64xf32> to vector<2x64xbf16>
    %cst_42 = arith.constant dense<0.000000e+00> : vector<2x64xf32>
    %269 = tpu.matmul %268, %261, %cst_42 {dimension_numbers = #tpu.dot_dimension_numbers<[1], [0], [0], [1], [0, 0, 1, 1], [], []>} : vector<2x64xbf16>, vector<64x64xbf16>, vector<2x64xf32> -> vector<2x64xf32>
    %270 = arith.addf %230, %269 : vector<2x64xf32>
    %271 = math.tanh %270 : vector<2x64xf32>
    %272 = arith.addf %267, %271 : vector<2x64xf32>
    %273 = arith.truncf %271 : vector<2x64xf32> to vector<2x64xbf16>
    %cst_43 = arith.constant dense<0.000000e+00> : vector<2x64xf32>
    %274 = tpu.matmul %273, %261, %cst_43 {dimension_numbers = #tpu.dot_dimension_numbers<[1], [0], [0], [1], [0, 0, 1, 1], [], []>} : vector<2x64xbf16>, vector<64x64xbf16>, vector<2x64xf32> -> vector<2x64xf32>
    %275 = arith.addf %235, %274 : vector<2x64xf32>
    %276 = math.tanh %275 : vector<2x64xf32>
    %277 = arith.addf %272, %276 : vector<2x64xf32>
    %278 = arith.truncf %276 : vector<2x64xf32> to vector<2x64xbf16>
    %cst_44 = arith.constant dense<0.000000e+00> : vector<2x64xf32>
    %279 = tpu.matmul %278, %261, %cst_44 {dimension_numbers = #tpu.dot_dimension_numbers<[1], [0], [0], [1], [0, 0, 1, 1], [], []>} : vector<2x64xbf16>, vector<64x64xbf16>, vector<2x64xf32> -> vector<2x64xf32>
    %280 = arith.addf %240, %279 : vector<2x64xf32>
    %281 = math.tanh %280 : vector<2x64xf32>
    %282 = arith.addf %277, %281 : vector<2x64xf32>
    %283 = arith.truncf %281 : vector<2x64xf32> to vector<2x64xbf16>
    %cst_45 = arith.constant dense<0.000000e+00> : vector<2x64xf32>
    %284 = tpu.matmul %283, %261, %cst_45 {dimension_numbers = #tpu.dot_dimension_numbers<[1], [0], [0], [1], [0, 0, 1, 1], [], []>} : vector<2x64xbf16>, vector<64x64xbf16>, vector<2x64xf32> -> vector<2x64xf32>
    %285 = arith.addf %245, %284 : vector<2x64xf32>
    %286 = math.tanh %285 : vector<2x64xf32>
    %287 = arith.addf %282, %286 : vector<2x64xf32>
    %288 = arith.truncf %286 : vector<2x64xf32> to vector<2x64xbf16>
    %cst_46 = arith.constant dense<0.000000e+00> : vector<2x64xf32>
    %289 = tpu.matmul %288, %261, %cst_46 {dimension_numbers = #tpu.dot_dimension_numbers<[1], [0], [0], [1], [0, 0, 1, 1], [], []>} : vector<2x64xbf16>, vector<64x64xbf16>, vector<2x64xf32> -> vector<2x64xf32>
    %290 = arith.addf %250, %289 : vector<2x64xf32>
    %291 = math.tanh %290 : vector<2x64xf32>
    %292 = arith.addf %287, %291 : vector<2x64xf32>
    %293 = arith.truncf %291 : vector<2x64xf32> to vector<2x64xbf16>
    %cst_47 = arith.constant dense<0.000000e+00> : vector<2x64xf32>
    %294 = tpu.matmul %293, %261, %cst_47 {dimension_numbers = #tpu.dot_dimension_numbers<[1], [0], [0], [1], [0, 0, 1, 1], [], []>} : vector<2x64xbf16>, vector<64x64xbf16>, vector<2x64xf32> -> vector<2x64xf32>
    %295 = arith.addf %255, %294 : vector<2x64xf32>
    %296 = math.tanh %295 : vector<2x64xf32>
    %297 = arith.addf %292, %296 : vector<2x64xf32>
    %298 = arith.truncf %296 : vector<2x64xf32> to vector<2x64xbf16>
    %cst_48 = arith.constant dense<0.000000e+00> : vector<2x64xf32>
    %299 = tpu.matmul %298, %261, %cst_48 {dimension_numbers = #tpu.dot_dimension_numbers<[1], [0], [0], [1], [0, 0, 1, 1], [], []>} : vector<2x64xbf16>, vector<64x64xbf16>, vector<2x64xf32> -> vector<2x64xf32>
    %300 = arith.addf %260, %299 : vector<2x64xf32>
    %301 = math.tanh %300 : vector<2x64xf32>
    %302 = arith.addf %297, %301 : vector<2x64xf32>
    %cst_49 = arith.constant 1.250000e-01 : f32
    %303 = vector.broadcast %cst_49 : f32 to vector<2x64xf32>
    %304 = arith.mulf %302, %303 : vector<2x64xf32>
    %305 = arith.truncf %304 : vector<2x64xf32> to vector<2x64xbf16>
    %c0_50 = arith.constant 0 : index
    %c0_51 = arith.constant 0 : index
    %306 = vector.load %arg10[%c0_50, %c0_51] : memref<64x4xbf16, #tpu.memory_space<vmem>>, vector<64x4xbf16>
    %cst_52 = arith.constant dense<0.000000e+00> : vector<2x4xf32>
    %307 = tpu.matmul %305, %306, %cst_52 {dimension_numbers = #tpu.dot_dimension_numbers<[1], [0], [0], [1], [0, 0, 1, 1], [], []>} : vector<2x64xbf16>, vector<64x4xbf16>, vector<2x4xf32> -> vector<2x4xf32>
    %c0_53 = arith.constant 0 : index
    %c0_54 = arith.constant 0 : index
    %308 = vector.load %arg11[%c0_53, %c0_54] : memref<1x4xf32, #tpu.memory_space<vmem>>, vector<1x4xf32>
    %309 = vector.broadcast %308 : vector<1x4xf32> to vector<2x4xf32>
    %310 = arith.addf %307, %309 : vector<2x4xf32>
    %cst_55 = arith.constant dense<0xFF800000> : vector<2xf32>
    %311 = vector.multi_reduction <maximumf>, %310, %cst_55 [1] : vector<2x4xf32> to vector<2xf32>
    %312 = vector.shape_cast %311 : vector<2xf32> to vector<2x1xf32>
    %313 = vector.broadcast %312 : vector<2x1xf32> to vector<2x4xf32>
    %314 = arith.subf %310, %313 : vector<2x4xf32>
    %315 = math.exp %314 : vector<2x4xf32>
    %cst_56 = arith.constant dense<0.000000e+00> : vector<2xf32>
    %316 = vector.multi_reduction <add>, %315, %cst_56 [1] : vector<2x4xf32> to vector<2xf32>
    %317 = vector.shape_cast %316 : vector<2xf32> to vector<2x1xf32>
    %318 = tpu.reciprocal %317 {approx = true} : vector<2x1xf32> -> vector<2x1xf32>
    %319 = vector.broadcast %318 : vector<2x1xf32> to vector<2x4xf32>
    %320 = arith.mulf %315, %319 : vector<2x4xf32>
    %c0_57 = arith.constant 0 : index
    %c0_58 = arith.constant 0 : index
    %321 = vector.load %arg12[%c0_57, %c0_58] : memref<2x4xf32, #tpu.memory_space<vmem>>, vector<2x4xf32>
    tpu.vector_store %arg12[%c0_57, %c0_58], %320 {strides = array<i32>} : memref<2x4xf32, #tpu.memory_space<vmem>>, vector<2x4xf32>,
    return
  }
}

</mosaic_0001>

<llo_original>
// kernel: rnn_forward.1
$region0: #{rnn_forward.1}
  #allocation0 [shape = 'u32[]', space=smem, size = 0x4, offset = 0x4, fixed_abs, tag = 'smem constant byte address 0x4 - core index']
  #allocation1 [shape = 'u32[144,128]{1,0:T(1,128)}', space=vmem, size = 0x12000, scoped, tag = 'internal scratch']
  %s0 = inlined_call_operand.vmem [shape: f32[16,32], index: 0, kind: input, shape index: {}]
  %s1 = inlined_call_operand.vmem [shape: bf16[32,64], index: 1, kind: input, shape index: {}]
  %s2 = inlined_call_operand.vmem [shape: bf16[64,64], index: 2, kind: input, shape index: {}]
  %s3 = inlined_call_operand.vmem [shape: f32[1,64], index: 3, kind: input, shape index: {}]
  %s4 = inlined_call_operand.vmem [shape: bf16[64,64], index: 4, kind: input, shape index: {}]
  %s5 = inlined_call_operand.vmem [shape: bf16[64,64], index: 5, kind: input, shape index: {}]
  %s6 = inlined_call_operand.vmem [shape: f32[1,64], index: 6, kind: input, shape index: {}]
  %s7 = inlined_call_operand.vmem [shape: bf16[64,64], index: 7, kind: input, shape index: {}]
  %s8 = inlined_call_operand.vmem [shape: bf16[64,64], index: 8, kind: input, shape index: {}]
  %s9 = inlined_call_operand.vmem [shape: f32[1,64], index: 9, kind: input, shape index: {}]
  %s10 = inlined_call_operand.vmem [shape: bf16[64,4], index: 10, kind: input, shape index: {}]
  %s11 = inlined_call_operand.vmem [shape: f32[1,4], index: 11, kind: input, shape index: {}]
  %s12 = inlined_call_operand.hbm [shape: f32[2,4], index: 12, kind: output, shape index: {}]
  %s13 = sld [smem:[#allocation0]]
  $region58: #{rnn_forward.1} parent=0
    _
  %s15 = ssub.s32 1, %s13
  %s16 = scalar_select 0, %s15, %s13
  $region1: #{rnn_forward.1} parent=0
    #allocation2 [shape = 'u8[1024]{0}', space=vmem, size = 0x400, scoped, tag = 'output window, operand 0, single buffered']
    #allocation3 [shape = 's32[1]{0}', space=sflag, size = 0x4, scoped, tag = 'scoped memory for rnn_forward.1']
    %17 = vsyncpa [#allocation3], 0
    // Predicated region
    $region2: #{rnn_forward.1} parent=1 // pred_check
      _
    $region3: #{rnn_forward.1} parent=1 // pred_check_branch
      %19 = sbr.rel (0) target = $region5
    $region4: #{rnn_forward.1} parent=1 // pred_region
      _
    $region5: #{rnn_forward.1} parent=1 // pred_fallthru
      _
    // Predicated region
    $region6: #{rnn_forward.1} parent=1 // pred_check
      _
    $region7: #{rnn_forward.1} parent=1 // pred_check_branch
      %21 = sbr.rel (0) target = $region9
    $region8: #{rnn_forward.1} parent=1 // pred_region
      _
    $region9: #{rnn_forward.1} parent=1 // pred_fallthru
      _
    // Predicated region
    $region10: #{rnn_forward.1} parent=1 // pred_check
      _
    $region11: #{rnn_forward.1} parent=1 // pred_check_branch
      %23 = sbr.rel (0) target = $region13
    $region12: #{rnn_forward.1} parent=1 // pred_region
      _
    $region13: #{rnn_forward.1} parent=1 // pred_fallthru
      _
    // Predicated region
    $region14: #{rnn_forward.1} parent=1 // pred_check
      _
    $region15: #{rnn_forward.1} parent=1 // pred_check_branch
      %25 = sbr.rel (0) target = $region17
    $region16: #{rnn_forward.1} parent=1 // pred_region
      _
    $region17: #{rnn_forward.1} parent=1 // pred_fallthru
      _
    // Predicated region
    $region18: #{rnn_forward.1} parent=1 // pred_check
      _
    $region19: #{rnn_forward.1} parent=1 // pred_check_branch
      %27 = sbr.rel (0) target = $region21
    $region20: #{rnn_forward.1} parent=1 // pred_region
      _
    $region21: #{rnn_forward.1} parent=1 // pred_fallthru
      _
    // Predicated region
    $region22: #{rnn_forward.1} parent=1 // pred_check
      _
    $region23: #{rnn_forward.1} parent=1 // pred_check_branch
      %29 = sbr.rel (0) target = $region25
    $region24: #{rnn_forward.1} parent=1 // pred_region
      _
    $region25: #{rnn_forward.1} parent=1 // pred_fallthru
      _
    // Predicated region
    $region26: #{rnn_forward.1} parent=1 // pred_check
      _
    $region27: #{rnn_forward.1} parent=1 // pred_check_branch
      %31 = sbr.rel (0) target = $region29
    $region28: #{rnn_forward.1} parent=1 // pred_region
      _
    $region29: #{rnn_forward.1} parent=1 // pred_fallthru
      _
    // Predicated region
    $region30: #{rnn_forward.1} parent=1 // pred_check
      _
    $region31: #{rnn_forward.1} parent=1 // pred_check_branch
      %33 = sbr.rel (0) target = $region33
    $region32: #{rnn_forward.1} parent=1 // pred_region
      _
    $region33: #{rnn_forward.1} parent=1 // pred_fallthru
      _
    // Predicated region
    $region34: #{rnn_forward.1} parent=1 // pred_check
      _
    $region35: #{rnn_forward.1} parent=1 // pred_check_branch
      %35 = sbr.rel (0) target = $region37
    $region36: #{rnn_forward.1} parent=1 // pred_region
      _
    $region37: #{rnn_forward.1} parent=1 // pred_fallthru
      _
    // Predicated region
    $region38: #{rnn_forward.1} parent=1 // pred_check
      _
    $region39: #{rnn_forward.1} parent=1 // pred_check_branch
      %37 = sbr.rel (0) target = $region41
    $region40: #{rnn_forward.1} parent=1 // pred_region
      _
    $region41: #{rnn_forward.1} parent=1 // pred_fallthru
      _
    // Predicated region
    $region42: #{rnn_forward.1} parent=1 // pred_check
      _
    $region43: #{rnn_forward.1} parent=1 // pred_check_branch
      %39 = sbr.rel (0) target = $region45
    $region44: #{rnn_forward.1} parent=1 // pred_region
      _
    $region45: #{rnn_forward.1} parent=1 // pred_fallthru
      _
    // Predicated region
    $region46: #{rnn_forward.1} parent=1 // pred_check
      _
    $region47: #{rnn_forward.1} parent=1 // pred_check_branch
      %41 = sbr.rel (0) target = $region49
    $region48: #{rnn_forward.1} parent=1 // pred_region
      _
    $region49: #{rnn_forward.1} parent=1 // pred_fallthru
      _
    %v43 = vlaneseq
    %v44 = vand.u32 %v43, 127
    %vm45 = vcmp.lt.s32.totalorder %v44, 32
    %v46 = vld [vmem:[%s0] sm:$0xff]
    %v47 = vld [vmem:[%s0 + $0x8] sm:$0xff]
    %v48 = vpack.c.bf16 %v47, %v46
    %v49 = vld [vmem:[%s1] sm:$0xf]
    %v50 = vld [vmem:[%s1 + $0x4] sm:$0xf]
    %v51 = vld [vmem:[%s1 + $0x8] sm:$0xf]
    %v52 = vld [vmem:[%s1 + $0xc] sm:$0xf]
    %v53 = vld [vmem:[%s3] sm:$0x1]
    %v55 = vlaneseq
    %v56 = vshrl.u32 %v55, 7
    %v57 = vsub.s32 0, %v56
    %v58 = vrot.slane %v53, %v57
    %v64 = vunpack.c.l.b16 %v49
    %v65 = vunpack.c.l.b16 %v50
    %v66 = vunpack.c.l.b16 %v51
    %v67 = vunpack.c.l.b16 %v52
    %v68 = vpack.c.b16 %v65, %v64
    %v69 = vpack.c.b16 %v67, %v66
    %vm72 = vcmask 261120
    %v74 = vsel %vm72, %v48, 0
    %76 = vmatprep.subr.bf16.mxu0 0
    %77 = vmatpush1.bf16.msra.mxu0 %v68
    %78 = vmatprep.subr.bf16.mxu0 0
    %79 = vmatpush1.bf16.msra.mxu0 %v69
    %80 = vmatprep.subr.bf16.mxu0 0
    %81 = vmatpush1.bf16.msra.mxu0 0
    %82 = vmatprep.subr.bf16.mxu0 0
    %83 = vmatpush1.bf16.msra.mxu0 0
    %84 = vmatprep.subr.bf16.mxu0 0
    %85 = vmatpush1.bf16.msra.mxu0 0
    %86 = vmatprep.subr.bf16.mxu0 0
    %87 = vmatpush1.bf16.msra.mxu0 0
    %88 = vmatprep.subr.bf16.mxu0 0
    %89 = vmatpush1.bf16.msra.mxu0 0
    %90 = vmatprep.subr.bf16.mxu0 0
    %91 = vmatpush1.bf16.msra.mxu0 0
    %92 = vmatprep.subr.bf16.mxu0 0
    %93 = vmatpush1.bf16.msra.mxu0 0
    %94 = vmatprep.subr.bf16.mxu0 0
    %95 = vmatpush1.bf16.msra.mxu0 0
    %96 = vmatprep.subr.bf16.mxu0 0
    %97 = vmatpush1.bf16.msra.mxu0 0
    %98 = vmatprep.subr.bf16.mxu0 0
    %99 = vmatpush1.bf16.msra.mxu0 0
    %100 = vmatprep.subr.bf16.mxu0 0
    %101 = vmatpush1.bf16.msra.mxu0 0
    %102 = vmatprep.subr.bf16.mxu0 0
    %103 = vmatpush1.bf16.msra.mxu0 0
    %104 = vmatprep.subr.bf16.mxu0 0
    %105 = vmatpush1.bf16.msra.mxu0 0
    %106 = vmatprep.subr.bf16.mxu0 0
    %107 = vmatpush1.bf16.msra.mxu0 0
    %108 = vmatprep.mubr.bf16.mxu0 0
    %109 = vmatmul.mubr.bf16.gmra.mrb[0].mxu0 %v74
    %v110 = vpop.f32.mrb[0].mxu0
    %v111 = vadd.f32 %v58, %v110
    %v112 = vpop.f32.mrb[0].mxu0
    %v113 = vpop.f32.mrb[0].mxu0
    %v114 = vadd.f32 %v58, %v113
    %v115 = vpop.f32.mrb[0].mxu0
    %116 = vdwg.mxu0
    %v117 = vsel %vm45, 1, 0
    %vm118 = vcmp.eq.s32.totalorder %v117, 1
    %v120 = vrot.slane %v114, 6
    %v122 = vsel %vm118, %v111, %v120
    %v123 = vrot.slane %v114, 2
    %v125 = vsel %vm118, %v111, %v123
    %v127 = vrot.slane %v111, 6
    %v129 = vsel %vm118, %v114, %v127
    %v130 = vrot.slane %v111, 2
    %v132 = vsel %vm118, %v114, %v130
    %v133 = vld [vmem:[%s2] sm:$0xf]
    %v134 = vld [vmem:[%s2 + $0x4] sm:$0xf]
    %v135 = vld [vmem:[%s2 + $0x8] sm:$0xf]
    %v136 = vld [vmem:[%s2 + $0xc] sm:$0xf]
    %v137 = vld [vmem:[%s2 + $0x10] sm:$0xf]
    %v138 = vld [vmem:[%s2 + $0x14] sm:$0xf]
    %v139 = vld [vmem:[%s2 + $0x18] sm:$0xf]
    %v140 = vld [vmem:[%s2 + $0x1c] sm:$0xf]
    %v149 = vunpack.c.l.b16 %v133
    %v150 = vunpack.c.l.b16 %v134
    %v151 = vunpack.c.l.b16 %v135
    %v152 = vunpack.c.l.b16 %v136
    %v153 = vunpack.c.l.b16 %v137
    %v154 = vunpack.c.l.b16 %v138
    %v155 = vunpack.c.l.b16 %v139
    %v156 = vunpack.c.l.b16 %v140
    %v157 = vpack.c.b16 %v150, %v149
    %v158 = vpack.c.b16 %v152, %v151
    %v159 = vpack.c.b16 %v154, %v153
    %v160 = vpack.c.b16 %v156, %v155
    %vm165 = vcmask 523264
    %v167 = vsel %vm165, 0, 0
    %169 = vmatprep.subr.bf16.mxu0 0
    %170 = vmatpush1.bf16.msra.mxu0 %v157
    %171 = vmatprep.subr.bf16.mxu0 0
    %172 = vmatpush1.bf16.msra.mxu0 %v158
    %173 = vmatprep.subr.bf16.mxu0 0
    %174 = vmatpush1.bf16.msra.mxu0 %v159
    %175 = vmatprep.subr.bf16.mxu0 0
    %176 = vmatpush1.bf16.msra.mxu0 %v160
    %177 = vmatprep.subr.bf16.mxu0 0
    %178 = vmatpush1.bf16.msra.mxu0 0
    %179 = vmatprep.subr.bf16.mxu0 0
    %180 = vmatpush1.bf16.msra.mxu0 0
    %181 = vmatprep.subr.bf16.mxu0 0
    %182 = vmatpush1.bf16.msra.mxu0 0
    %183 = vmatprep.subr.bf16.mxu0 0
    %184 = vmatpush1.bf16.msra.mxu0 0
    %185 = vmatprep.subr.bf16.mxu0 0
    %186 = vmatpush1.bf16.msra.mxu0 0
    %187 = vmatprep.subr.bf16.mxu0 0
    %188 = vmatpush1.bf16.msra.mxu0 0
    %189 = vmatprep.subr.bf16.mxu0 0
    %190 = vmatpush1.bf16.msra.mxu0 0
    %191 = vmatprep.subr.bf16.mxu0 0
    %192 = vmatpush1.bf16.msra.mxu0 0
    %193 = vmatprep.subr.bf16.mxu0 0
    %194 = vmatpush1.bf16.msra.mxu0 0
    %195 = vmatprep.subr.bf16.mxu0 0
    %196 = vmatpush1.bf16.msra.mxu0 0
    %197 = vmatprep.subr.bf16.mxu0 0
    %198 = vmatpush1.bf16.msra.mxu0 0
    %199 = vmatprep.subr.bf16.mxu0 0
    %200 = vmatpush1.bf16.msra.mxu0 0
    %201 = vmatprep.mubr.bf16.mxu0 0
    %202 = vmatmul.mubr.bf16.gmra.mrb[0].mxu0 %v167
    %v203 = vpop.f32.mrb[0].mxu0
    %v204 = vadd.f32 0.0, %v203
    %v205 = vpop.f32.mrb[0].mxu0
    %v206 = vpop.f32.mrb[0].mxu0
    %v207 = vpop.f32.mrb[0].mxu0
    %208 = vdwg.mxu0
    %v209 = vadd.f32 %v122, %v204
    %v210 = vtanh.pop %v209
    %v211 = vpack.c.bf16 %v210, %v210
    %v213 = vsel %vm165, %v211, 0
    %215 = vmatprep.subr.bf16.mxu0 0
    %216 = vmatpush1.bf16.msra.mxu0 %v157
    %217 = vmatprep.subr.bf16.mxu0 0
    %218 = vmatpush1.bf16.msra.mxu0 %v158
    %219 = vmatprep.subr.bf16.mxu0 0
    %220 = vmatpush1.bf16.msra.mxu0 %v159
    %221 = vmatprep.subr.bf16.mxu0 0
    %222 = vmatpush1.bf16.msra.mxu0 %v160
    %223 = vmatprep.subr.bf16.mxu0 0
    %224 = vmatpush1.bf16.msra.mxu0 0
    %225 = vmatprep.subr.bf16.mxu0 0
    %226 = vmatpush1.bf16.msra.mxu0 0
    %227 = vmatprep.subr.bf16.mxu0 0
    %228 = vmatpush1.bf16.msra.mxu0 0
    %229 = vmatprep.subr.bf16.mxu0 0
    %230 = vmatpush1.bf16.msra.mxu0 0
    %231 = vmatprep.subr.bf16.mxu0 0
    %232 = vmatpush1.bf16.msra.mxu0 0
    %233 = vmatprep.subr.bf16.mxu0 0
    %234 = vmatpush1.bf16.msra.mxu0 0
    %235 = vmatprep.subr.bf16.mxu0 0
    %236 = vmatpush1.bf16.msra.mxu0 0
    %237 = vmatprep.subr.bf16.mxu0 0
    %238 = vmatpush1.bf16.msra.mxu0 0
    %239 = vmatprep.subr.bf16.mxu0 0
    %240 = vmatpush1.bf16.msra.mxu0 0
    %241 = vmatprep.subr.bf16.mxu0 0
    %242 = vmatpush1.bf16.msra.mxu0 0
    %243 = vmatprep.subr.bf16.mxu0 0
    %244 = vmatpush1.bf16.msra.mxu0 0
    %245 = vmatprep.subr.bf16.mxu0 0
    %246 = vmatpush1.bf16.msra.mxu0 0
    %247 = vmatprep.mubr.bf16.mxu0 0
    %248 = vmatmul.mubr.bf16.gmra.mrb[0].mxu0 %v213
    %v249 = vpop.f32.mrb[0].mxu0
    %v250 = vadd.f32 0.0, %v249
    %v251 = vpop.f32.mrb[0].mxu0
    %v252 = vpop.f32.mrb[0].mxu0
    %v253 = vpop.f32.mrb[0].mxu0
    %254 = vdwg.mxu0
    %v256 = vrot.slane %v250, 6
    %v258 = vadd.f32 %v125, %v256
    %v259 = vtanh.pop %v258
    %v260 = vpack.c.bf16 %v259, %v259
    %v262 = vrot.slane %v260, 1
    %v264 = vsel %vm165, %v262, 0
    %266 = vmatprep.subr.bf16.mxu0 0
    %267 = vmatpush1.bf16.msra.mxu0 %v157
    %268 = vmatprep.subr.bf16.mxu0 0
    %269 = vmatpush1.bf16.msra.mxu0 %v158
    %270 = vmatprep.subr.bf16.mxu0 0
    %271 = vmatpush1.bf16.msra.mxu0 %v159
    %272 = vmatprep.subr.bf16.mxu0 0
    %273 = vmatpush1.bf16.msra.mxu0 %v160
    %274 = vmatprep.subr.bf16.mxu0 0
    %275 = vmatpush1.bf16.msra.mxu0 0
    %276 = vmatprep.subr.bf16.mxu0 0
    %277 = vmatpush1.bf16.msra.mxu0 0
    %278 = vmatprep.subr.bf16.mxu0 0
    %279 = vmatpush1.bf16.msra.mxu0 0
    %280 = vmatprep.subr.bf16.mxu0 0
    %281 = vmatpush1.bf16.msra.mxu0 0
    %282 = vmatprep.subr.bf16.mxu0 0
    %283 = vmatpush1.bf16.msra.mxu0 0
    %284 = vmatprep.subr.bf16.mxu0 0
    %285 = vmatpush1.bf16.msra.mxu0 0
    %286 = vmatprep.subr.bf16.mxu0 0
    %287 = vmatpush1.bf16.msra.mxu0 0
    %288 = vmatprep.subr.bf16.mxu0 0
    %289 = vmatpush1.bf16.msra.mxu0 0
    %290 = vmatprep.subr.bf16.mxu0 0
    %291 = vmatpush1.bf16.msra.mxu0 0
    %292 = vmatprep.subr.bf16.mxu0 0
    %293 = vmatpush1.bf16.msra.mxu0 0
    %294 = vmatprep.subr.bf16.mxu0 0
    %295 = vmatpush1.bf16.msra.mxu0 0
    %296 = vmatprep.subr.bf16.mxu0 0
    %297 = vmatpush1.bf16.msra.mxu0 0
    %298 = vmatprep.mubr.bf16.mxu0 0
    %299 = vmatmul.mubr.bf16.gmra.mrb[0].mxu0 %v264
    %v300 = vpop.f32.mrb[0].mxu0
    %v301 = vadd.f32 0.0, %v300
    %v302 = vpop.f32.mrb[0].mxu0
    %v303 = vpop.f32.mrb[0].mxu0
    %v304 = vpop.f32.mrb[0].mxu0
    %305 = vdwg.mxu0
    %v307 = vrot.slane %v301, 4
    %v309 = vadd.f32 %v122, %v307
    %v310 = vtanh.pop %v309
    %v311 = vpack.c.bf16 %v310, %v310
    %v313 = vrot.slane %v311, 2
    %v315 = vsel %vm165, %v313, 0
    %317 = vmatprep.subr.bf16.mxu0 0
    %318 = vmatpush1.bf16.msra.mxu0 %v157
    %319 = vmatprep.subr.bf16.mxu0 0
    %320 = vmatpush1.bf16.msra.mxu0 %v158
    %321 = vmatprep.subr.bf16.mxu0 0
    %322 = vmatpush1.bf16.msra.mxu0 %v159
    %323 = vmatprep.subr.bf16.mxu0 0
    %324 = vmatpush1.bf16.msra.mxu0 %v160
    %325 = vmatprep.subr.bf16.mxu0 0
    %326 = vmatpush1.bf16.msra.mxu0 0
    %327 = vmatprep.subr.bf16.mxu0 0
    %328 = vmatpush1.bf16.msra.mxu0 0
    %329 = vmatprep.subr.bf16.mxu0 0
    %330 = vmatpush1.bf16.msra.mxu0 0
    %331 = vmatprep.subr.bf16.mxu0 0
    %332 = vmatpush1.bf16.msra.mxu0 0
    %333 = vmatprep.subr.bf16.mxu0 0
    %334 = vmatpush1.bf16.msra.mxu0 0
    %335 = vmatprep.subr.bf16.mxu0 0
    %336 = vmatpush1.bf16.msra.mxu0 0
    %337 = vmatprep.subr.bf16.mxu0 0
    %338 = vmatpush1.bf16.msra.mxu0 0
    %339 = vmatprep.subr.bf16.mxu0 0
    %340 = vmatpush1.bf16.msra.mxu0 0
    %341 = vmatprep.subr.bf16.mxu0 0
    %342 = vmatpush1.bf16.msra.mxu0 0
    %343 = vmatprep.subr.bf16.mxu0 0
    %344 = vmatpush1.bf16.msra.mxu0 0
    %345 = vmatprep.subr.bf16.mxu0 0
    %346 = vmatpush1.bf16.msra.mxu0 0
    %347 = vmatprep.subr.bf16.mxu0 0
    %348 = vmatpush1.bf16.msra.mxu0 0
    %349 = vmatprep.mubr.bf16.mxu0 0
    %350 = vmatmul.mubr.bf16.gmra.mrb[0].mxu0 %v315
    %v351 = vpop.f32.mrb[0].mxu0
    %v352 = vadd.f32 0.0, %v351
    %v353 = vpop.f32.mrb[0].mxu0
    %v354 = vpop.f32.mrb[0].mxu0
    %v355 = vpop.f32.mrb[0].mxu0
    %356 = vdwg.mxu0
    %v358 = vrot.slane %v352, 2
    %v360 = vadd.f32 %v125, %v358
    %v361 = vtanh.pop %v360
    %v362 = vpack.c.bf16 %v361, %v361
    %v364 = vrot.slane %v362, 3
    %v366 = vsel %vm165, %v364, 0
    %368 = vmatprep.subr.bf16.mxu0 0
    %369 = vmatpush1.bf16.msra.mxu0 %v157
    %370 = vmatprep.subr.bf16.mxu0 0
    %371 = vmatpush1.bf16.msra.mxu0 %v158
    %372 = vmatprep.subr.bf16.mxu0 0
    %373 = vmatpush1.bf16.msra.mxu0 %v159
    %374 = vmatprep.subr.bf16.mxu0 0
    %375 = vmatpush1.bf16.msra.mxu0 %v160
    %376 = vmatprep.subr.bf16.mxu0 0
    %377 = vmatpush1.bf16.msra.mxu0 0
    %378 = vmatprep.subr.bf16.mxu0 0
    %379 = vmatpush1.bf16.msra.mxu0 0
    %380 = vmatprep.subr.bf16.mxu0 0
    %381 = vmatpush1.bf16.msra.mxu0 0
    %382 = vmatprep.subr.bf16.mxu0 0
    %383 = vmatpush1.bf16.msra.mxu0 0
    %384 = vmatprep.subr.bf16.mxu0 0
    %385 = vmatpush1.bf16.msra.mxu0 0
    %386 = vmatprep.subr.bf16.mxu0 0
    %387 = vmatpush1.bf16.msra.mxu0 0
    %388 = vmatprep.subr.bf16.mxu0 0
    %389 = vmatpush1.bf16.msra.mxu0 0
    %390 = vmatprep.subr.bf16.mxu0 0
    %391 = vmatpush1.bf16.msra.mxu0 0
    %392 = vmatprep.subr.bf16.mxu0 0
    %393 = vmatpush1.bf16.msra.mxu0 0
    %394 = vmatprep.subr.bf16.mxu0 0
    %395 = vmatpush1.bf16.msra.mxu0 0
    %396 = vmatprep.subr.bf16.mxu0 0
    %397 = vmatpush1.bf16.msra.mxu0 0
    %398 = vmatprep.subr.bf16.mxu0 0
    %399 = vmatpush1.bf16.msra.mxu0 0
    %400 = vmatprep.mubr.bf16.mxu0 0
    %401 = vmatmul.mubr.bf16.gmra.mrb[0].mxu0 %v366
    %v402 = vpop.f32.mrb[0].mxu0
    %v403 = vadd.f32 0.0, %v402
    %v404 = vpop.f32.mrb[0].mxu0
    %v405 = vpop.f32.mrb[0].mxu0
    %v406 = vpop.f32.mrb[0].mxu0
    %407 = vdwg.mxu0
    %v408 = vadd.f32 %v129, %v403
    %v409 = vtanh.pop %v408
    %v410 = vpack.c.bf16 %v409, %v409
    %v412 = vsel %vm165, %v410, 0
    %414 = vmatprep.subr.bf16.mxu0 0
    %415 = vmatpush1.bf16.msra.mxu0 %v157
    %416 = vmatprep.subr.bf16.mxu0 0
    %417 = vmatpush1.bf16.msra.mxu0 %v158
    %418 = vmatprep.subr.bf16.mxu0 0
    %419 = vmatpush1.bf16.msra.mxu0 %v159
    %420 = vmatprep.subr.bf16.mxu0 0
    %421 = vmatpush1.bf16.msra.mxu0 %v160
    %422 = vmatprep.subr.bf16.mxu0 0
    %423 = vmatpush1.bf16.msra.mxu0 0
    %424 = vmatprep.subr.bf16.mxu0 0
    %425 = vmatpush1.bf16.msra.mxu0 0
    %426 = vmatprep.subr.bf16.mxu0 0
    %427 = vmatpush1.bf16.msra.mxu0 0
    %428 = vmatprep.subr.bf16.mxu0 0
    %429 = vmatpush1.bf16.msra.mxu0 0
    %430 = vmatprep.subr.bf16.mxu0 0
    %431 = vmatpush1.bf16.msra.mxu0 0
    %432 = vmatprep.subr.bf16.mxu0 0
    %433 = vmatpush1.bf16.msra.mxu0 0
    %434 = vmatprep.subr.bf16.mxu0 0
    %435 = vmatpush1.bf16.msra.mxu0 0
    %436 = vmatprep.subr.bf16.mxu0 0
    %437 = vmatpush1.bf16.msra.mxu0 0
    %438 = vmatprep.subr.bf16.mxu0 0
    %439 = vmatpush1.bf16.msra.mxu0 0
    %440 = vmatprep.subr.bf16.mxu0 0
    %441 = vmatpush1.bf16.msra.mxu0 0
    %442 = vmatprep.subr.bf16.mxu0 0
    %443 = vmatpush1.bf16.msra.mxu0 0
    %444 = vmatprep.subr.bf16.mxu0 0
    %445 = vmatpush1.bf16.msra.mxu0 0
    %446 = vmatprep.mubr.bf16.mxu0 0
    %447 = vmatmul.mubr.bf16.gmra.mrb[0].mxu0 %v412
    %v448 = vpop.f32.mrb[0].mxu0
    %v449 = vadd.f32 0.0, %v448
    %v450 = vpop.f32.mrb[0].mxu0
    %v451 = vpop.f32.mrb[0].mxu0
    %v452 = vpop.f32.mrb[0].mxu0
    %453 = vdwg.mxu0
    %v455 = vrot.slane %v449, 6
    %v457 = vadd.f32 %v132, %v455
    %v458 = vtanh.pop %v457
    %v459 = vpack.c.bf16 %v458, %v458
    %v461 = vrot.slane %v459, 1
    %v463 = vsel %vm165, %v461, 0
    %465 = vmatprep.subr.bf16.mxu0 0
    %466 = vmatpush1.bf16.msra.mxu0 %v157
    %467 = vmatprep.subr.bf16.mxu0 0
    %468 = vmatpush1.bf16.msra.mxu0 %v158
    %469 = vmatprep.subr.bf16.mxu0 0
    %470 = vmatpush1.bf16.msra.mxu0 %v159
    %471 = vmatprep.subr.bf16.mxu0 0
    %472 = vmatpush1.bf16.msra.mxu0 %v160
    %473 = vmatprep.subr.bf16.mxu0 0
    %474 = vmatpush1.bf16.msra.mxu0 0
    %475 = vmatprep.subr.bf16.mxu0 0
    %476 = vmatpush1.bf16.msra.mxu0 0
    %477 = vmatprep.subr.bf16.mxu0 0
    %478 = vmatpush1.bf16.msra.mxu0 0
    %479 = vmatprep.subr.bf16.mxu0 0
    %480 = vmatpush1.bf16.msra.mxu0 0
    %481 = vmatprep.subr.bf16.mxu0 0
    %482 = vmatpush1.bf16.msra.mxu0 0
    %483 = vmatprep.subr.bf16.mxu0 0
    %484 = vmatpush1.bf16.msra.mxu0 0
    %485 = vmatprep.subr.bf16.mxu0 0
    %486 = vmatpush1.bf16.msra.mxu0 0
    %487 = vmatprep.subr.bf16.mxu0 0
    %488 = vmatpush1.bf16.msra.mxu0 0
    %489 = vmatprep.subr.bf16.mxu0 0
    %490 = vmatpush1.bf16.msra.mxu0 0
    %491 = vmatprep.subr.bf16.mxu0 0
    %492 = vmatpush1.bf16.msra.mxu0 0
    %493 = vmatprep.subr.bf16.mxu0 0
    %494 = vmatpush1.bf16.msra.mxu0 0
    %495 = vmatprep.subr.bf16.mxu0 0
    %496 = vmatpush1.bf16.msra.mxu0 0
    %497 = vmatprep.mubr.bf16.mxu0 0
    %498 = vmatmul.mubr.bf16.gmra.mrb[0].mxu0 %v463
    %v499 = vpop.f32.mrb[0].mxu0
    %v500 = vadd.f32 0.0, %v499
    %v501 = vpop.f32.mrb[0].mxu0
    %v502 = vpop.f32.mrb[0].mxu0
    %v503 = vpop.f32.mrb[0].mxu0
    %504 = vdwg.mxu0
    %v506 = vrot.slane %v500, 4
    %v508 = vadd.f32 %v129, %v506
    %v509 = vtanh.pop %v508
    %v510 = vpack.c.bf16 %v509, %v509
    %v512 = vrot.slane %v510, 2
    %v514 = vsel %vm165, %v512, 0
    %516 = vmatprep.subr.bf16.mxu0 0
    %517 = vmatpush1.bf16.msra.mxu0 %v157
    %518 = vmatprep.subr.bf16.mxu0 0
    %519 = vmatpush1.bf16.msra.mxu0 %v158
    %520 = vmatprep.subr.bf16.mxu0 0
    %521 = vmatpush1.bf16.msra.mxu0 %v159
    %522 = vmatprep.subr.bf16.mxu0 0
    %523 = vmatpush1.bf16.msra.mxu0 %v160
    %524 = vmatprep.subr.bf16.mxu0 0
    %525 = vmatpush1.bf16.msra.mxu0 0
    %526 = vmatprep.subr.bf16.mxu0 0
    %527 = vmatpush1.bf16.msra.mxu0 0
    %528 = vmatprep.subr.bf16.mxu0 0
    %529 = vmatpush1.bf16.msra.mxu0 0
    %530 = vmatprep.subr.bf16.mxu0 0
    %531 = vmatpush1.bf16.msra.mxu0 0
    %532 = vmatprep.subr.bf16.mxu0 0
    %533 = vmatpush1.bf16.msra.mxu0 0
    %534 = vmatprep.subr.bf16.mxu0 0
    %535 = vmatpush1.bf16.msra.mxu0 0
    %536 = vmatprep.subr.bf16.mxu0 0
    %537 = vmatpush1.bf16.msra.mxu0 0
    %538 = vmatprep.subr.bf16.mxu0 0
    %539 = vmatpush1.bf16.msra.mxu0 0
    %540 = vmatprep.subr.bf16.mxu0 0
    %541 = vmatpush1.bf16.msra.mxu0 0
    %542 = vmatprep.subr.bf16.mxu0 0
    %543 = vmatpush1.bf16.msra.mxu0 0
    %544 = vmatprep.subr.bf16.mxu0 0
    %545 = vmatpush1.bf16.msra.mxu0 0
    %546 = vmatprep.subr.bf16.mxu0 0
    %547 = vmatpush1.bf16.msra.mxu0 0
    %548 = vmatprep.mubr.bf16.mxu0 0
    %549 = vmatmul.mubr.bf16.gmra.mrb[0].mxu0 %v514
    %v550 = vpop.f32.mrb[0].mxu0
    %v551 = vadd.f32 0.0, %v550
    %v552 = vpop.f32.mrb[0].mxu0
    %v553 = vpop.f32.mrb[0].mxu0
    %v554 = vpop.f32.mrb[0].mxu0
    %555 = vdwg.mxu0
    %v557 = vrot.slane %v551, 2
    %v559 = vadd.f32 %v132, %v557
    %v560 = vtanh.pop %v559
    %v562 = vrot.slane %v560, 6
    %v564 = vsel %vm118, %v210, %v562
    %v566 = vrot.slane %v509, 2
    %v568 = vsel %vm118, %v259, %v566
    %v570 = vrot.slane %v458, 6
    %v572 = vsel %vm118, %v310, %v570
    %v574 = vrot.slane %v409, 2
    %v576 = vsel %vm118, %v361, %v574
    %v578 = vrot.slane %v361, 6
    %v580 = vsel %vm118, %v409, %v578
    %v582 = vrot.slane %v310, 2
    %v584 = vsel %vm118, %v458, %v582
    %v586 = vrot.slane %v259, 6
    %v588 = vsel %vm118, %v509, %v586
    %v590 = vrot.slane %v210, 2
    %v592 = vsel %vm118, %v560, %v590
    %vm593 = vcmask 1041408
    %v594 = vsel %vm593, %v564, %v568
    %vm595 = vcmask 1043456
    %v596 = vsel %vm595, %v594, %v572
    %vm597 = vcmask 1045504
    %v598 = vsel %vm597, %v596, %v576
    %v599 = vsel %vm593, %v580, %v584
    %v600 = vsel %vm595, %v599, %v588
    %v601 = vsel %vm597, %v600, %v592
    %v602 = vpack.c.bf16 %v601, %v598
    %v603 = vld [vmem:[%s4] sm:$0xf]
    %v604 = vld [vmem:[%s4 + $0x4] sm:$0xf]
    %v605 = vld [vmem:[%s4 + $0x8] sm:$0xf]
    %v606 = vld [vmem:[%s4 + $0xc] sm:$0xf]
    %v607 = vld [vmem:[%s4 + $0x10] sm:$0xf]
    %v608 = vld [vmem:[%s4 + $0x14] sm:$0xf]
    %v609 = vld [vmem:[%s4 + $0x18] sm:$0xf]
    %v610 = vld [vmem:[%s4 + $0x1c] sm:$0xf]
    %v611 = vld [vmem:[%s6] sm:$0x1]
    %v613 = vlaneseq
    %v614 = vshrl.u32 %v613, 7
    %v615 = vsub.s32 0, %v614
    %v616 = vrot.slane %v611, %v615
    %v626 = vunpack.c.l.b16 %v603
    %v627 = vunpack.c.l.b16 %v604
    %v628 = vunpack.c.l.b16 %v605
    %v629 = vunpack.c.l.b16 %v606
    %v630 = vunpack.c.l.b16 %v607
    %v631 = vunpack.c.l.b16 %v608
    %v632 = vunpack.c.l.b16 %v609
    %v633 = vunpack.c.l.b16 %v610
    %v634 = vpack.c.b16 %v627, %v626
    %v635 = vpack.c.b16 %v629, %v628
    %v636 = vpack.c.b16 %v631, %v630
    %v637 = vpack.c.b16 %v633, %v632
    %v643 = vsel %vm165, %v602, 0
    %645 = vmatprep.subr.bf16.mxu0 0
    %646 = vmatpush1.bf16.msra.mxu0 %v634
    %647 = vmatprep.subr.bf16.mxu0 0
    %648 = vmatpush1.bf16.msra.mxu0 %v635
    %649 = vmatprep.subr.bf16.mxu0 0
    %650 = vmatpush1.bf16.msra.mxu0 %v636
    %651 = vmatprep.subr.bf16.mxu0 0
    %652 = vmatpush1.bf16.msra.mxu0 %v637
    %653 = vmatprep.subr.bf16.mxu0 0
    %654 = vmatpush1.bf16.msra.mxu0 0
    %655 = vmatprep.subr.bf16.mxu0 0
    %656 = vmatpush1.bf16.msra.mxu0 0
    %657 = vmatprep.subr.bf16.mxu0 0
    %658 = vmatpush1.bf16.msra.mxu0 0
    %659 = vmatprep.subr.bf16.mxu0 0
    %660 = vmatpush1.bf16.msra.mxu0 0
    %661 = vmatprep.subr.bf16.mxu0 0
    %662 = vmatpush1.bf16.msra.mxu0 0
    %663 = vmatprep.subr.bf16.mxu0 0
    %664 = vmatpush1.bf16.msra.mxu0 0
    %665 = vmatprep.subr.bf16.mxu0 0
    %666 = vmatpush1.bf16.msra.mxu0 0
    %667 = vmatprep.subr.bf16.mxu0 0
    %668 = vmatpush1.bf16.msra.mxu0 0
    %669 = vmatprep.subr.bf16.mxu0 0
    %670 = vmatpush1.bf16.msra.mxu0 0
    %671 = vmatprep.subr.bf16.mxu0 0
    %672 = vmatpush1.bf16.msra.mxu0 0
    %673 = vmatprep.subr.bf16.mxu0 0
    %674 = vmatpush1.bf16.msra.mxu0 0
    %675 = vmatprep.subr.bf16.mxu0 0
    %676 = vmatpush1.bf16.msra.mxu0 0
    %677 = vmatprep.mubr.bf16.mxu0 0
    %678 = vmatmul.mubr.bf16.gmra.mrb[0].mxu0 %v643
    %v679 = vpop.f32.mrb[0].mxu0
    %v680 = vadd.f32 %v616, %v679
    %v681 = vpop.f32.mrb[0].mxu0
    %v682 = vpop.f32.mrb[0].mxu0
    %v683 = vadd.f32 %v616, %v682
    %v684 = vpop.f32.mrb[0].mxu0
    %685 = vdwg.mxu0
    %v687 = vrot.slane %v683, 6
    %v689 = vsel %vm118, %v680, %v687
    %v690 = vrot.slane %v683, 2
    %v692 = vsel %vm118, %v680, %v690
    %v694 = vrot.slane %v680, 6
    %v696 = vsel %vm118, %v683, %v694
    %v697 = vrot.slane %v680, 2
    %v699 = vsel %vm118, %v683, %v697
    %v700 = vld [vmem:[%s5] sm:$0xf]
    %v701 = vld [vmem:[%s5 + $0x4] sm:$0xf]
    %v702 = vld [vmem:[%s5 + $0x8] sm:$0xf]
    %v703 = vld [vmem:[%s5 + $0xc] sm:$0xf]
    %v704 = vld [vmem:[%s5 + $0x10] sm:$0xf]
    %v705 = vld [vmem:[%s5 + $0x14] sm:$0xf]
    %v706 = vld [vmem:[%s5 + $0x18] sm:$0xf]
    %v707 = vld [vmem:[%s5 + $0x1c] sm:$0xf]
    %v716 = vunpack.c.l.b16 %v700
    %v717 = vunpack.c.l.b16 %v701
    %v718 = vunpack.c.l.b16 %v702
    %v719 = vunpack.c.l.b16 %v703
    %v720 = vunpack.c.l.b16 %v704
    %v721 = vunpack.c.l.b16 %v705
    %v722 = vunpack.c.l.b16 %v706
    %v723 = vunpack.c.l.b16 %v707
    %v724 = vpack.c.b16 %v717, %v716
    %v725 = vpack.c.b16 %v719, %v718
    %v726 = vpack.c.b16 %v721, %v720
    %v727 = vpack.c.b16 %v723, %v722
    %732 = vmatprep.subr.bf16.mxu0 0
    %733 = vmatpush1.bf16.msra.mxu0 %v724
    %734 = vmatprep.subr.bf16.mxu0 0
    %735 = vmatpush1.bf16.msra.mxu0 %v725
    %736 = vmatprep.subr.bf16.mxu0 0
    %737 = vmatpush1.bf16.msra.mxu0 %v726
    %738 = vmatprep.subr.bf16.mxu0 0
    %739 = vmatpush1.bf16.msra.mxu0 %v727
    %740 = vmatprep.subr.bf16.mxu0 0
    %741 = vmatpush1.bf16.msra.mxu0 0
    %742 = vmatprep.subr.bf16.mxu0 0
    %743 = vmatpush1.bf16.msra.mxu0 0
    %744 = vmatprep.subr.bf16.mxu0 0
    %745 = vmatpush1.bf16.msra.mxu0 0
    %746 = vmatprep.subr.bf16.mxu0 0
    %747 = vmatpush1.bf16.msra.mxu0 0
    %748 = vmatprep.subr.bf16.mxu0 0
    %749 = vmatpush1.bf16.msra.mxu0 0
    %750 = vmatprep.subr.bf16.mxu0 0
    %751 = vmatpush1.bf16.msra.mxu0 0
    %752 = vmatprep.subr.bf16.mxu0 0
    %753 = vmatpush1.bf16.msra.mxu0 0
    %754 = vmatprep.subr.bf16.mxu0 0
    %755 = vmatpush1.bf16.msra.mxu0 0
    %756 = vmatprep.subr.bf16.mxu0 0
    %757 = vmatpush1.bf16.msra.mxu0 0
    %758 = vmatprep.subr.bf16.mxu0 0
    %759 = vmatpush1.bf16.msra.mxu0 0
    %760 = vmatprep.subr.bf16.mxu0 0
    %761 = vmatpush1.bf16.msra.mxu0 0
    %762 = vmatprep.subr.bf16.mxu0 0
    %763 = vmatpush1.bf16.msra.mxu0 0
    %764 = vmatprep.mubr.bf16.mxu0 0
    %765 = vmatmul.mubr.bf16.gmra.mrb[0].mxu0 %v167
    %v766 = vpop.f32.mrb[0].mxu0
    %v767 = vadd.f32 0.0, %v766
    %v768 = vpop.f32.mrb[0].mxu0
    %v769 = vpop.f32.mrb[0].mxu0
    %v770 = vpop.f32.mrb[0].mxu0
    %771 = vdwg.mxu0
    %v772 = vadd.f32 %v689, %v767
    %v773 = vtanh.pop %v772
    %v774 = vpack.c.bf16 %v773, %v773
    %v776 = vsel %vm165, %v774, 0
    %778 = vmatprep.subr.bf16.mxu0 0
    %779 = vmatpush1.bf16.msra.mxu0 %v724
    %780 = vmatprep.subr.bf16.mxu0 0
    %781 = vmatpush1.bf16.msra.mxu0 %v725
    %782 = vmatprep.subr.bf16.mxu0 0
    %783 = vmatpush1.bf16.msra.mxu0 %v726
    %784 = vmatprep.subr.bf16.mxu0 0
    %785 = vmatpush1.bf16.msra.mxu0 %v727
    %786 = vmatprep.subr.bf16.mxu0 0
    %787 = vmatpush1.bf16.msra.mxu0 0
    %788 = vmatprep.subr.bf16.mxu0 0
    %789 = vmatpush1.bf16.msra.mxu0 0
    %790 = vmatprep.subr.bf16.mxu0 0
    %791 = vmatpush1.bf16.msra.mxu0 0
    %792 = vmatprep.subr.bf16.mxu0 0
    %793 = vmatpush1.bf16.msra.mxu0 0
    %794 = vmatprep.subr.bf16.mxu0 0
    %795 = vmatpush1.bf16.msra.mxu0 0
    %796 = vmatprep.subr.bf16.mxu0 0
    %797 = vmatpush1.bf16.msra.mxu0 0
    %798 = vmatprep.subr.bf16.mxu0 0
    %799 = vmatpush1.bf16.msra.mxu0 0
    %800 = vmatprep.subr.bf16.mxu0 0
    %801 = vmatpush1.bf16.msra.mxu0 0
    %802 = vmatprep.subr.bf16.mxu0 0
    %803 = vmatpush1.bf16.msra.mxu0 0
    %804 = vmatprep.subr.bf16.mxu0 0
    %805 = vmatpush1.bf16.msra.mxu0 0
    %806 = vmatprep.subr.bf16.mxu0 0
    %807 = vmatpush1.bf16.msra.mxu0 0
    %808 = vmatprep.subr.bf16.mxu0 0
    %809 = vmatpush1.bf16.msra.mxu0 0
    %810 = vmatprep.mubr.bf16.mxu0 0
    %811 = vmatmul.mubr.bf16.gmra.mrb[0].mxu0 %v776
    %v812 = vpop.f32.mrb[0].mxu0
    %v813 = vadd.f32 0.0, %v812
    %v814 = vpop.f32.mrb[0].mxu0
    %v815 = vpop.f32.mrb[0].mxu0
    %v816 = vpop.f32.mrb[0].mxu0
    %817 = vdwg.mxu0
    %v819 = vrot.slane %v813, 6
    %v821 = vadd.f32 %v692, %v819
    %v822 = vtanh.pop %v821
    %v823 = vpack.c.bf16 %v822, %v822
    %v825 = vrot.slane %v823, 1
    %v827 = vsel %vm165, %v825, 0
    %829 = vmatprep.subr.bf16.mxu0 0
    %830 = vmatpush1.bf16.msra.mxu0 %v724
    %831 = vmatprep.subr.bf16.mxu0 0
    %832 = vmatpush1.bf16.msra.mxu0 %v725
    %833 = vmatprep.subr.bf16.mxu0 0
    %834 = vmatpush1.bf16.msra.mxu0 %v726
    %835 = vmatprep.subr.bf16.mxu0 0
    %836 = vmatpush1.bf16.msra.mxu0 %v727
    %837 = vmatprep.subr.bf16.mxu0 0
    %838 = vmatpush1.bf16.msra.mxu0 0
    %839 = vmatprep.subr.bf16.mxu0 0
    %840 = vmatpush1.bf16.msra.mxu0 0
    %841 = vmatprep.subr.bf16.mxu0 0
    %842 = vmatpush1.bf16.msra.mxu0 0
    %843 = vmatprep.subr.bf16.mxu0 0
    %844 = vmatpush1.bf16.msra.mxu0 0
    %845 = vmatprep.subr.bf16.mxu0 0
    %846 = vmatpush1.bf16.msra.mxu0 0
    %847 = vmatprep.subr.bf16.mxu0 0
    %848 = vmatpush1.bf16.msra.mxu0 0
    %849 = vmatprep.subr.bf16.mxu0 0
    %850 = vmatpush1.bf16.msra.mxu0 0
    %851 = vmatprep.subr.bf16.mxu0 0
    %852 = vmatpush1.bf16.msra.mxu0 0
    %853 = vmatprep.subr.bf16.mxu0 0
    %854 = vmatpush1.bf16.msra.mxu0 0
    %855 = vmatprep.subr.bf16.mxu0 0
    %856 = vmatpush1.bf16.msra.mxu0 0
    %857 = vmatprep.subr.bf16.mxu0 0
    %858 = vmatpush1.bf16.msra.mxu0 0
    %859 = vmatprep.subr.bf16.mxu0 0
    %860 = vmatpush1.bf16.msra.mxu0 0
    %861 = vmatprep.mubr.bf16.mxu0 0
    %862 = vmatmul.mubr.bf16.gmra.mrb[0].mxu0 %v827
    %v863 = vpop.f32.mrb[0].mxu0
    %v864 = vadd.f32 0.0, %v863
    %v865 = vpop.f32.mrb[0].mxu0
    %v866 = vpop.f32.mrb[0].mxu0
    %v867 = vpop.f32.mrb[0].mxu0
    %868 = vdwg.mxu0
    %v870 = vrot.slane %v864, 4
    %v872 = vadd.f32 %v689, %v870
    %v873 = vtanh.pop %v872
    %v874 = vpack.c.bf16 %v873, %v873
    %v876 = vrot.slane %v874, 2
    %v878 = vsel %vm165, %v876, 0
    %880 = vmatprep.subr.bf16.mxu0 0
    %881 = vmatpush1.bf16.msra.mxu0 %v724
    %882 = vmatprep.subr.bf16.mxu0 0
    %883 = vmatpush1.bf16.msra.mxu0 %v725
    %884 = vmatprep.subr.bf16.mxu0 0
    %885 = vmatpush1.bf16.msra.mxu0 %v726
    %886 = vmatprep.subr.bf16.mxu0 0
    %887 = vmatpush1.bf16.msra.mxu0 %v727
    %888 = vmatprep.subr.bf16.mxu0 0
    %889 = vmatpush1.bf16.msra.mxu0 0
    %890 = vmatprep.subr.bf16.mxu0 0
    %891 = vmatpush1.bf16.msra.mxu0 0
    %892 = vmatprep.subr.bf16.mxu0 0
    %893 = vmatpush1.bf16.msra.mxu0 0
    %894 = vmatprep.subr.bf16.mxu0 0
    %895 = vmatpush1.bf16.msra.mxu0 0
    %896 = vmatprep.subr.bf16.mxu0 0
    %897 = vmatpush1.bf16.msra.mxu0 0
    %898 = vmatprep.subr.bf16.mxu0 0
    %899 = vmatpush1.bf16.msra.mxu0 0
    %900 = vmatprep.subr.bf16.mxu0 0
    %901 = vmatpush1.bf16.msra.mxu0 0
    %902 = vmatprep.subr.bf16.mxu0 0
    %903 = vmatpush1.bf16.msra.mxu0 0
    %904 = vmatprep.subr.bf16.mxu0 0
    %905 = vmatpush1.bf16.msra.mxu0 0
    %906 = vmatprep.subr.bf16.mxu0 0
    %907 = vmatpush1.bf16.msra.mxu0 0
    %908 = vmatprep.subr.bf16.mxu0 0
    %909 = vmatpush1.bf16.msra.mxu0 0
    %910 = vmatprep.subr.bf16.mxu0 0
    %911 = vmatpush1.bf16.msra.mxu0 0
    %912 = vmatprep.mubr.bf16.mxu0 0
    %913 = vmatmul.mubr.bf16.gmra.mrb[0].mxu0 %v878
    %v914 = vpop.f32.mrb[0].mxu0
    %v915 = vadd.f32 0.0, %v914
    %v916 = vpop.f32.mrb[0].mxu0
    %v917 = vpop.f32.mrb[0].mxu0
    %v918 = vpop.f32.mrb[0].mxu0
    %919 = vdwg.mxu0
    %v921 = vrot.slane %v915, 2
    %v923 = vadd.f32 %v692, %v921
    %v924 = vtanh.pop %v923
    %v925 = vpack.c.bf16 %v924, %v924
    %v927 = vrot.slane %v925, 3
    %v929 = vsel %vm165, %v927, 0
    %931 = vmatprep.subr.bf16.mxu0 0
    %932 = vmatpush1.bf16.msra.mxu0 %v724
    %933 = vmatprep.subr.bf16.mxu0 0
    %934 = vmatpush1.bf16.msra.mxu0 %v725
    %935 = vmatprep.subr.bf16.mxu0 0
    %936 = vmatpush1.bf16.msra.mxu0 %v726
    %937 = vmatprep.subr.bf16.mxu0 0
    %938 = vmatpush1.bf16.msra.mxu0 %v727
    %939 = vmatprep.subr.bf16.mxu0 0
    %940 = vmatpush1.bf16.msra.mxu0 0
    %941 = vmatprep.subr.bf16.mxu0 0
    %942 = vmatpush1.bf16.msra.mxu0 0
    %943 = vmatprep.subr.bf16.mxu0 0
    %944 = vmatpush1.bf16.msra.mxu0 0
    %945 = vmatprep.subr.bf16.mxu0 0
    %946 = vmatpush1.bf16.msra.mxu0 0
    %947 = vmatprep.subr.bf16.mxu0 0
    %948 = vmatpush1.bf16.msra.mxu0 0
    %949 = vmatprep.subr.bf16.mxu0 0
    %950 = vmatpush1.bf16.msra.mxu0 0
    %951 = vmatprep.subr.bf16.mxu0 0
    %952 = vmatpush1.bf16.msra.mxu0 0
    %953 = vmatprep.subr.bf16.mxu0 0
    %954 = vmatpush1.bf16.msra.mxu0 0
    %955 = vmatprep.subr.bf16.mxu0 0
    %956 = vmatpush1.bf16.msra.mxu0 0
    %957 = vmatprep.subr.bf16.mxu0 0
    %958 = vmatpush1.bf16.msra.mxu0 0
    %959 = vmatprep.subr.bf16.mxu0 0
    %960 = vmatpush1.bf16.msra.mxu0 0
    %961 = vmatprep.subr.bf16.mxu0 0
    %962 = vmatpush1.bf16.msra.mxu0 0
    %963 = vmatprep.mubr.bf16.mxu0 0
    %964 = vmatmul.mubr.bf16.gmra.mrb[0].mxu0 %v929
    %v965 = vpop.f32.mrb[0].mxu0
    %v966 = vadd.f32 0.0, %v965
    %v967 = vpop.f32.mrb[0].mxu0
    %v968 = vpop.f32.mrb[0].mxu0
    %v969 = vpop.f32.mrb[0].mxu0
    %970 = vdwg.mxu0
    %v971 = vadd.f32 %v696, %v966
    %v972 = vtanh.pop %v971
    %v973 = vpack.c.bf16 %v972, %v972
    %v975 = vsel %vm165, %v973, 0
    %977 = vmatprep.subr.bf16.mxu0 0
    %978 = vmatpush1.bf16.msra.mxu0 %v724
    %979 = vmatprep.subr.bf16.mxu0 0
    %980 = vmatpush1.bf16.msra.mxu0 %v725
    %981 = vmatprep.subr.bf16.mxu0 0
    %982 = vmatpush1.bf16.msra.mxu0 %v726
    %983 = vmatprep.subr.bf16.mxu0 0
    %984 = vmatpush1.bf16.msra.mxu0 %v727
    %985 = vmatprep.subr.bf16.mxu0 0
    %986 = vmatpush1.bf16.msra.mxu0 0
    %987 = vmatprep.subr.bf16.mxu0 0
    %988 = vmatpush1.bf16.msra.mxu0 0
    %989 = vmatprep.subr.bf16.mxu0 0
    %990 = vmatpush1.bf16.msra.mxu0 0
    %991 = vmatprep.subr.bf16.mxu0 0
    %992 = vmatpush1.bf16.msra.mxu0 0
    %993 = vmatprep.subr.bf16.mxu0 0
    %994 = vmatpush1.bf16.msra.mxu0 0
    %995 = vmatprep.subr.bf16.mxu0 0
    %996 = vmatpush1.bf16.msra.mxu0 0
    %997 = vmatprep.subr.bf16.mxu0 0
    %998 = vmatpush1.bf16.msra.mxu0 0
    %999 = vmatprep.subr.bf16.mxu0 0
    %1000 = vmatpush1.bf16.msra.mxu0 0
    %1001 = vmatprep.subr.bf16.mxu0 0
    %1002 = vmatpush1.bf16.msra.mxu0 0
    %1003 = vmatprep.subr.bf16.mxu0 0
    %1004 = vmatpush1.bf16.msra.mxu0 0
    %1005 = vmatprep.subr.bf16.mxu0 0
    %1006 = vmatpush1.bf16.msra.mxu0 0
    %1007 = vmatprep.subr.bf16.mxu0 0
    %1008 = vmatpush1.bf16.msra.mxu0 0
    %1009 = vmatprep.mubr.bf16.mxu0 0
    %1010 = vmatmul.mubr.bf16.gmra.mrb[0].mxu0 %v975
    %v1011 = vpop.f32.mrb[0].mxu0
    %v1012 = vadd.f32 0.0, %v1011
    %v1013 = vpop.f32.mrb[0].mxu0
    %v1014 = vpop.f32.mrb[0].mxu0
    %v1015 = vpop.f32.mrb[0].mxu0
    %1016 = vdwg.mxu0
    %v1018 = vrot.slane %v1012, 6
    %v1020 = vadd.f32 %v699, %v1018
    %v1021 = vtanh.pop %v1020
    %v1022 = vpack.c.bf16 %v1021, %v1021
    %v1024 = vrot.slane %v1022, 1
    %v1026 = vsel %vm165, %v1024, 0
    %1028 = vmatprep.subr.bf16.mxu0 0
    %1029 = vmatpush1.bf16.msra.mxu0 %v724
    %1030 = vmatprep.subr.bf16.mxu0 0
    %1031 = vmatpush1.bf16.msra.mxu0 %v725
    %1032 = vmatprep.subr.bf16.mxu0 0
    %1033 = vmatpush1.bf16.msra.mxu0 %v726
    %1034 = vmatprep.subr.bf16.mxu0 0
    %1035 = vmatpush1.bf16.msra.mxu0 %v727
    %1036 = vmatprep.subr.bf16.mxu0 0
    %1037 = vmatpush1.bf16.msra.mxu0 0
    %1038 = vmatprep.subr.bf16.mxu0 0
    %1039 = vmatpush1.bf16.msra.mxu0 0
    %1040 = vmatprep.subr.bf16.mxu0 0
    %1041 = vmatpush1.bf16.msra.mxu0 0
    %1042 = vmatprep.subr.bf16.mxu0 0
    %1043 = vmatpush1.bf16.msra.mxu0 0
    %1044 = vmatprep.subr.bf16.mxu0 0
    %1045 = vmatpush1.bf16.msra.mxu0 0
    %1046 = vmatprep.subr.bf16.mxu0 0
    %1047 = vmatpush1.bf16.msra.mxu0 0
    %1048 = vmatprep.subr.bf16.mxu0 0
    %1049 = vmatpush1.bf16.msra.mxu0 0
    %1050 = vmatprep.subr.bf16.mxu0 0
    %1051 = vmatpush1.bf16.msra.mxu0 0
    %1052 = vmatprep.subr.bf16.mxu0 0
    %1053 = vmatpush1.bf16.msra.mxu0 0
    %1054 = vmatprep.subr.bf16.mxu0 0
    %1055 = vmatpush1.bf16.msra.mxu0 0
    %1056 = vmatprep.subr.bf16.mxu0 0
    %1057 = vmatpush1.bf16.msra.mxu0 0
    %1058 = vmatprep.subr.bf16.mxu0 0
    %1059 = vmatpush1.bf16.msra.mxu0 0
    %1060 = vmatprep.mubr.bf16.mxu0 0
    %1061 = vmatmul.mubr.bf16.gmra.mrb[0].mxu0 %v1026
    %v1062 = vpop.f32.mrb[0].mxu0
    %v1063 = vadd.f32 0.0, %v1062
    %v1064 = vpop.f32.mrb[0].mxu0
    %v1065 = vpop.f32.mrb[0].mxu0
    %v1066 = vpop.f32.mrb[0].mxu0
    %1067 = vdwg.mxu0
    %v1069 = vrot.slane %v1063, 4
    %v1071 = vadd.f32 %v696, %v1069
    %v1072 = vtanh.pop %v1071
    %v1073 = vpack.c.bf16 %v1072, %v1072
    %v1075 = vrot.slane %v1073, 2
    %v1077 = vsel %vm165, %v1075, 0
    %1079 = vmatprep.subr.bf16.mxu0 0
    %1080 = vmatpush1.bf16.msra.mxu0 %v724
    %1081 = vmatprep.subr.bf16.mxu0 0
    %1082 = vmatpush1.bf16.msra.mxu0 %v725
    %1083 = vmatprep.subr.bf16.mxu0 0
    %1084 = vmatpush1.bf16.msra.mxu0 %v726
    %1085 = vmatprep.subr.bf16.mxu0 0
    %1086 = vmatpush1.bf16.msra.mxu0 %v727
    %1087 = vmatprep.subr.bf16.mxu0 0
    %1088 = vmatpush1.bf16.msra.mxu0 0
    %1089 = vmatprep.subr.bf16.mxu0 0
    %1090 = vmatpush1.bf16.msra.mxu0 0
    %1091 = vmatprep.subr.bf16.mxu0 0
    %1092 = vmatpush1.bf16.msra.mxu0 0
    %1093 = vmatprep.subr.bf16.mxu0 0
    %1094 = vmatpush1.bf16.msra.mxu0 0
    %1095 = vmatprep.subr.bf16.mxu0 0
    %1096 = vmatpush1.bf16.msra.mxu0 0
    %1097 = vmatprep.subr.bf16.mxu0 0
    %1098 = vmatpush1.bf16.msra.mxu0 0
    %1099 = vmatprep.subr.bf16.mxu0 0
    %1100 = vmatpush1.bf16.msra.mxu0 0
    %1101 = vmatprep.subr.bf16.mxu0 0
    %1102 = vmatpush1.bf16.msra.mxu0 0
    %1103 = vmatprep.subr.bf16.mxu0 0
    %1104 = vmatpush1.bf16.msra.mxu0 0
    %1105 = vmatprep.subr.bf16.mxu0 0
    %1106 = vmatpush1.bf16.msra.mxu0 0
    %1107 = vmatprep.subr.bf16.mxu0 0
    %1108 = vmatpush1.bf16.msra.mxu0 0
    %1109 = vmatprep.subr.bf16.mxu0 0
    %1110 = vmatpush1.bf16.msra.mxu0 0
    %1111 = vmatprep.mubr.bf16.mxu0 0
    %1112 = vmatmul.mubr.bf16.gmra.mrb[0].mxu0 %v1077
    %v1113 = vpop.f32.mrb[0].mxu0
    %v1114 = vadd.f32 0.0, %v1113
    %v1115 = vpop.f32.mrb[0].mxu0
    %v1116 = vpop.f32.mrb[0].mxu0
    %v1117 = vpop.f32.mrb[0].mxu0
    %1118 = vdwg.mxu0
    %v1120 = vrot.slane %v1114, 2
    %v1122 = vadd.f32 %v699, %v1120
    %v1123 = vtanh.pop %v1122
    %v1125 = vrot.slane %v1123, 6
    %v1127 = vsel %vm118, %v773, %v1125
    %v1129 = vrot.slane %v1072, 2
    %v1131 = vsel %vm118, %v822, %v1129
    %v1133 = vrot.slane %v1021, 6
    %v1135 = vsel %vm118, %v873, %v1133
    %v1137 = vrot.slane %v972, 2
    %v1139 = vsel %vm118, %v924, %v1137
    %v1141 = vrot.slane %v924, 6
    %v1143 = vsel %vm118, %v972, %v1141
    %v1145 = vrot.slane %v873, 2
    %v1147 = vsel %vm118, %v1021, %v1145
    %v1149 = vrot.slane %v822, 6
    %v1151 = vsel %vm118, %v1072, %v1149
    %v1153 = vrot.slane %v773, 2
    %v1155 = vsel %vm118, %v1123, %v1153
    %v1156 = vsel %vm593, %v1127, %v1131
    %v1157 = vsel %vm595, %v1156, %v1135
    %v1158 = vsel %vm597, %v1157, %v1139
    %v1159 = vsel %vm593, %v1143, %v1147
    %v1160 = vsel %vm595, %v1159, %v1151
    %v1161 = vsel %vm597, %v1160, %v1155
    %v1162 = vpack.c.bf16 %v1161, %v1158
    %v1163 = vld [vmem:[%s7] sm:$0xf]
    %v1164 = vld [vmem:[%s7 + $0x4] sm:$0xf]
    %v1165 = vld [vmem:[%s7 + $0x8] sm:$0xf]
    %v1166 = vld [vmem:[%s7 + $0xc] sm:$0xf]
    %v1167 = vld [vmem:[%s7 + $0x10] sm:$0xf]
    %v1168 = vld [vmem:[%s7 + $0x14] sm:$0xf]
    %v1169 = vld [vmem:[%s7 + $0x18] sm:$0xf]
    %v1170 = vld [vmem:[%s7 + $0x1c] sm:$0xf]
    %v1171 = vld [vmem:[%s9] sm:$0x1]
    %v1173 = vlaneseq
    %v1174 = vshrl.u32 %v1173, 7
    %v1175 = vsub.s32 0, %v1174
    %v1176 = vrot.slane %v1171, %v1175
    %v1186 = vunpack.c.l.b16 %v1163
    %v1187 = vunpack.c.l.b16 %v1164
    %v1188 = vunpack.c.l.b16 %v1165
    %v1189 = vunpack.c.l.b16 %v1166
    %v1190 = vunpack.c.l.b16 %v1167
    %v1191 = vunpack.c.l.b16 %v1168
    %v1192 = vunpack.c.l.b16 %v1169
    %v1193 = vunpack.c.l.b16 %v1170
    %v1194 = vpack.c.b16 %v1187, %v1186
    %v1195 = vpack.c.b16 %v1189, %v1188
    %v1196 = vpack.c.b16 %v1191, %v1190
    %v1197 = vpack.c.b16 %v1193, %v1192
    %v1203 = vsel %vm165, %v1162, 0
    %1205 = vmatprep.subr.bf16.mxu0 0
    %1206 = vmatpush1.bf16.msra.mxu0 %v1194
    %1207 = vmatprep.subr.bf16.mxu0 0
    %1208 = vmatpush1.bf16.msra.mxu0 %v1195
    %1209 = vmatprep.subr.bf16.mxu0 0
    %1210 = vmatpush1.bf16.msra.mxu0 %v1196
    %1211 = vmatprep.subr.bf16.mxu0 0
    %1212 = vmatpush1.bf16.msra.mxu0 %v1197
    %1213 = vmatprep.subr.bf16.mxu0 0
    %1214 = vmatpush1.bf16.msra.mxu0 0
    %1215 = vmatprep.subr.bf16.mxu0 0
    %1216 = vmatpush1.bf16.msra.mxu0 0
    %1217 = vmatprep.subr.bf16.mxu0 0
    %1218 = vmatpush1.bf16.msra.mxu0 0
    %1219 = vmatprep.subr.bf16.mxu0 0
    %1220 = vmatpush1.bf16.msra.mxu0 0
    %1221 = vmatprep.subr.bf16.mxu0 0
    %1222 = vmatpush1.bf16.msra.mxu0 0
    %1223 = vmatprep.subr.bf16.mxu0 0
    %1224 = vmatpush1.bf16.msra.mxu0 0
    %1225 = vmatprep.subr.bf16.mxu0 0
    %1226 = vmatpush1.bf16.msra.mxu0 0
    %1227 = vmatprep.subr.bf16.mxu0 0
    %1228 = vmatpush1.bf16.msra.mxu0 0
    %1229 = vmatprep.subr.bf16.mxu0 0
    %1230 = vmatpush1.bf16.msra.mxu0 0
    %1231 = vmatprep.subr.bf16.mxu0 0
    %1232 = vmatpush1.bf16.msra.mxu0 0
    %1233 = vmatprep.subr.bf16.mxu0 0
    %1234 = vmatpush1.bf16.msra.mxu0 0
    %1235 = vmatprep.subr.bf16.mxu0 0
    %1236 = vmatpush1.bf16.msra.mxu0 0
    %1237 = vmatprep.mubr.bf16.mxu0 0
    %1238 = vmatmul.mubr.bf16.gmra.mrb[0].mxu0 %v1203
    %v1239 = vpop.f32.mrb[0].mxu0
    %v1240 = vadd.f32 %v1176, %v1239
    %v1241 = vpop.f32.mrb[0].mxu0
    %v1242 = vpop.f32.mrb[0].mxu0
    %v1243 = vadd.f32 %v1176, %v1242
    %v1244 = vpop.f32.mrb[0].mxu0
    %1245 = vdwg.mxu0
    %v1247 = vrot.slane %v1243, 6
    %v1249 = vsel %vm118, %v1240, %v1247
    %v1250 = vrot.slane %v1243, 2
    %v1252 = vsel %vm118, %v1240, %v1250
    %v1254 = vrot.slane %v1240, 6
    %v1256 = vsel %vm118, %v1243, %v1254
    %v1257 = vrot.slane %v1240, 2
    %v1259 = vsel %vm118, %v1243, %v1257
    %v1260 = vld [vmem:[%s8] sm:$0xf]
    %v1261 = vld [vmem:[%s8 + $0x4] sm:$0xf]
    %v1262 = vld [vmem:[%s8 + $0x8] sm:$0xf]
    %v1263 = vld [vmem:[%s8 + $0xc] sm:$0xf]
    %v1264 = vld [vmem:[%s8 + $0x10] sm:$0xf]
    %v1265 = vld [vmem:[%s8 + $0x14] sm:$0xf]
    %v1266 = vld [vmem:[%s8 + $0x18] sm:$0xf]
    %v1267 = vld [vmem:[%s8 + $0x1c] sm:$0xf]
    %v1276 = vunpack.c.l.b16 %v1260
    %v1277 = vunpack.c.l.b16 %v1261
    %v1278 = vunpack.c.l.b16 %v1262
    %v1279 = vunpack.c.l.b16 %v1263
    %v1280 = vunpack.c.l.b16 %v1264
    %v1281 = vunpack.c.l.b16 %v1265
    %v1282 = vunpack.c.l.b16 %v1266
    %v1283 = vunpack.c.l.b16 %v1267
    %v1284 = vpack.c.b16 %v1277, %v1276
    %v1285 = vpack.c.b16 %v1279, %v1278
    %v1286 = vpack.c.b16 %v1281, %v1280
    %v1287 = vpack.c.b16 %v1283, %v1282
    %1292 = vmatprep.subr.bf16.mxu0 0
    %1293 = vmatpush1.bf16.msra.mxu0 %v1284
    %1294 = vmatprep.subr.bf16.mxu0 0
    %1295 = vmatpush1.bf16.msra.mxu0 %v1285
    %1296 = vmatprep.subr.bf16.mxu0 0
    %1297 = vmatpush1.bf16.msra.mxu0 %v1286
    %1298 = vmatprep.subr.bf16.mxu0 0
    %1299 = vmatpush1.bf16.msra.mxu0 %v1287
    %1300 = vmatprep.subr.bf16.mxu0 0
    %1301 = vmatpush1.bf16.msra.mxu0 0
    %1302 = vmatprep.subr.bf16.mxu0 0
    %1303 = vmatpush1.bf16.msra.mxu0 0
    %1304 = vmatprep.subr.bf16.mxu0 0
    %1305 = vmatpush1.bf16.msra.mxu0 0
    %1306 = vmatprep.subr.bf16.mxu0 0
    %1307 = vmatpush1.bf16.msra.mxu0 0
    %1308 = vmatprep.subr.bf16.mxu0 0
    %1309 = vmatpush1.bf16.msra.mxu0 0
    %1310 = vmatprep.subr.bf16.mxu0 0
    %1311 = vmatpush1.bf16.msra.mxu0 0
    %1312 = vmatprep.subr.bf16.mxu0 0
    %1313 = vmatpush1.bf16.msra.mxu0 0
    %1314 = vmatprep.subr.bf16.mxu0 0
    %1315 = vmatpush1.bf16.msra.mxu0 0
    %1316 = vmatprep.subr.bf16.mxu0 0
    %1317 = vmatpush1.bf16.msra.mxu0 0
    %1318 = vmatprep.subr.bf16.mxu0 0
    %1319 = vmatpush1.bf16.msra.mxu0 0
    %1320 = vmatprep.subr.bf16.mxu0 0
    %1321 = vmatpush1.bf16.msra.mxu0 0
    %1322 = vmatprep.subr.bf16.mxu0 0
    %1323 = vmatpush1.bf16.msra.mxu0 0
    %1324 = vmatprep.mubr.bf16.mxu0 0
    %1325 = vmatmul.mubr.bf16.gmra.mrb[0].mxu0 %v167
    %v1326 = vpop.f32.mrb[0].mxu0
    %v1327 = vadd.f32 0.0, %v1326
    %v1328 = vpop.f32.mrb[0].mxu0
    %v1329 = vpop.f32.mrb[0].mxu0
    %v1330 = vpop.f32.mrb[0].mxu0
    %1331 = vdwg.mxu0
    %v1332 = vadd.f32 %v1249, %v1327
    %v1333 = vtanh.pop %v1332
    %v1334 = vadd.f32 %v1333, 0.0
    %v1335 = vpack.c.bf16 %v1333, %v1333
    %v1337 = vsel %vm165, %v1335, 0
    %1339 = vmatprep.subr.bf16.mxu0 0
    %1340 = vmatpush1.bf16.msra.mxu0 %v1284
    %1341 = vmatprep.subr.bf16.mxu0 0
    %1342 = vmatpush1.bf16.msra.mxu0 %v1285
    %1343 = vmatprep.subr.bf16.mxu0 0
    %1344 = vmatpush1.bf16.msra.mxu0 %v1286
    %1345 = vmatprep.subr.bf16.mxu0 0
    %1346 = vmatpush1.bf16.msra.mxu0 %v1287
    %1347 = vmatprep.subr.bf16.mxu0 0
    %1348 = vmatpush1.bf16.msra.mxu0 0
    %1349 = vmatprep.subr.bf16.mxu0 0
    %1350 = vmatpush1.bf16.msra.mxu0 0
    %1351 = vmatprep.subr.bf16.mxu0 0
    %1352 = vmatpush1.bf16.msra.mxu0 0
    %1353 = vmatprep.subr.bf16.mxu0 0
    %1354 = vmatpush1.bf16.msra.mxu0 0
    %1355 = vmatprep.subr.bf16.mxu0 0
    %1356 = vmatpush1.bf16.msra.mxu0 0
    %1357 = vmatprep.subr.bf16.mxu0 0
    %1358 = vmatpush1.bf16.msra.mxu0 0
    %1359 = vmatprep.subr.bf16.mxu0 0
    %1360 = vmatpush1.bf16.msra.mxu0 0
    %1361 = vmatprep.subr.bf16.mxu0 0
    %1362 = vmatpush1.bf16.msra.mxu0 0
    %1363 = vmatprep.subr.bf16.mxu0 0
    %1364 = vmatpush1.bf16.msra.mxu0 0
    %1365 = vmatprep.subr.bf16.mxu0 0
    %1366 = vmatpush1.bf16.msra.mxu0 0
    %1367 = vmatprep.subr.bf16.mxu0 0
    %1368 = vmatpush1.bf16.msra.mxu0 0
    %1369 = vmatprep.subr.bf16.mxu0 0
    %1370 = vmatpush1.bf16.msra.mxu0 0
    %1371 = vmatprep.mubr.bf16.mxu0 0
    %1372 = vmatmul.mubr.bf16.gmra.mrb[0].mxu0 %v1337
    %v1373 = vpop.f32.mrb[0].mxu0
    %v1374 = vadd.f32 0.0, %v1373
    %v1375 = vpop.f32.mrb[0].mxu0
    %v1376 = vpop.f32.mrb[0].mxu0
    %v1377 = vpop.f32.mrb[0].mxu0
    %1378 = vdwg.mxu0
    %v1380 = vrot.slane %v1374, 6
    %v1382 = vadd.f32 %v1252, %v1380
    %v1383 = vtanh.pop %v1382
    %v1385 = vrot.slane %v1383, 2
    %v1387 = vadd.f32 %v1334, %v1385
    %v1388 = vpack.c.bf16 %v1383, %v1383
    %v1390 = vrot.slane %v1388, 1
    %v1392 = vsel %vm165, %v1390, 0
    %1394 = vmatprep.subr.bf16.mxu0 0
    %1395 = vmatpush1.bf16.msra.mxu0 %v1284
    %1396 = vmatprep.subr.bf16.mxu0 0
    %1397 = vmatpush1.bf16.msra.mxu0 %v1285
    %1398 = vmatprep.subr.bf16.mxu0 0
    %1399 = vmatpush1.bf16.msra.mxu0 %v1286
    %1400 = vmatprep.subr.bf16.mxu0 0
    %1401 = vmatpush1.bf16.msra.mxu0 %v1287
    %1402 = vmatprep.subr.bf16.mxu0 0
    %1403 = vmatpush1.bf16.msra.mxu0 0
    %1404 = vmatprep.subr.bf16.mxu0 0
    %1405 = vmatpush1.bf16.msra.mxu0 0
    %1406 = vmatprep.subr.bf16.mxu0 0
    %1407 = vmatpush1.bf16.msra.mxu0 0
    %1408 = vmatprep.subr.bf16.mxu0 0
    %1409 = vmatpush1.bf16.msra.mxu0 0
    %1410 = vmatprep.subr.bf16.mxu0 0
    %1411 = vmatpush1.bf16.msra.mxu0 0
    %1412 = vmatprep.subr.bf16.mxu0 0
    %1413 = vmatpush1.bf16.msra.mxu0 0
    %1414 = vmatprep.subr.bf16.mxu0 0
    %1415 = vmatpush1.bf16.msra.mxu0 0
    %1416 = vmatprep.subr.bf16.mxu0 0
    %1417 = vmatpush1.bf16.msra.mxu0 0
    %1418 = vmatprep.subr.bf16.mxu0 0
    %1419 = vmatpush1.bf16.msra.mxu0 0
    %1420 = vmatprep.subr.bf16.mxu0 0
    %1421 = vmatpush1.bf16.msra.mxu0 0
    %1422 = vmatprep.subr.bf16.mxu0 0
    %1423 = vmatpush1.bf16.msra.mxu0 0
    %1424 = vmatprep.subr.bf16.mxu0 0
    %1425 = vmatpush1.bf16.msra.mxu0 0
    %1426 = vmatprep.mubr.bf16.mxu0 0
    %1427 = vmatmul.mubr.bf16.gmra.mrb[0].mxu0 %v1392
    %v1428 = vpop.f32.mrb[0].mxu0
    %v1429 = vadd.f32 0.0, %v1428
    %v1430 = vpop.f32.mrb[0].mxu0
    %v1431 = vpop.f32.mrb[0].mxu0
    %v1432 = vpop.f32.mrb[0].mxu0
    %1433 = vdwg.mxu0
    %v1435 = vrot.slane %v1429, 4
    %v1437 = vadd.f32 %v1249, %v1435
    %v1438 = vtanh.pop %v1437
    %v1440 = vrot.slane %v1438, 4
    %v1442 = vadd.f32 %v1387, %v1440
    %v1443 = vpack.c.bf16 %v1438, %v1438
    %v1445 = vrot.slane %v1443, 2
    %v1447 = vsel %vm165, %v1445, 0
    %1449 = vmatprep.subr.bf16.mxu0 0
    %1450 = vmatpush1.bf16.msra.mxu0 %v1284
    %1451 = vmatprep.subr.bf16.mxu0 0
    %1452 = vmatpush1.bf16.msra.mxu0 %v1285
    %1453 = vmatprep.subr.bf16.mxu0 0
    %1454 = vmatpush1.bf16.msra.mxu0 %v1286
    %1455 = vmatprep.subr.bf16.mxu0 0
    %1456 = vmatpush1.bf16.msra.mxu0 %v1287
    %1457 = vmatprep.subr.bf16.mxu0 0
    %1458 = vmatpush1.bf16.msra.mxu0 0
    %1459 = vmatprep.subr.bf16.mxu0 0
    %1460 = vmatpush1.bf16.msra.mxu0 0
    %1461 = vmatprep.subr.bf16.mxu0 0
    %1462 = vmatpush1.bf16.msra.mxu0 0
    %1463 = vmatprep.subr.bf16.mxu0 0
    %1464 = vmatpush1.bf16.msra.mxu0 0
    %1465 = vmatprep.subr.bf16.mxu0 0
    %1466 = vmatpush1.bf16.msra.mxu0 0
    %1467 = vmatprep.subr.bf16.mxu0 0
    %1468 = vmatpush1.bf16.msra.mxu0 0
    %1469 = vmatprep.subr.bf16.mxu0 0
    %1470 = vmatpush1.bf16.msra.mxu0 0
    %1471 = vmatprep.subr.bf16.mxu0 0
    %1472 = vmatpush1.bf16.msra.mxu0 0
    %1473 = vmatprep.subr.bf16.mxu0 0
    %1474 = vmatpush1.bf16.msra.mxu0 0
    %1475 = vmatprep.subr.bf16.mxu0 0
    %1476 = vmatpush1.bf16.msra.mxu0 0
    %1477 = vmatprep.subr.bf16.mxu0 0
    %1478 = vmatpush1.bf16.msra.mxu0 0
    %1479 = vmatprep.subr.bf16.mxu0 0
    %1480 = vmatpush1.bf16.msra.mxu0 0
    %1481 = vmatprep.mubr.bf16.mxu0 0
    %1482 = vmatmul.mubr.bf16.gmra.mrb[0].mxu0 %v1447
    %v1483 = vpop.f32.mrb[0].mxu0
    %v1484 = vadd.f32 0.0, %v1483
    %v1485 = vpop.f32.mrb[0].mxu0
    %v1486 = vpop.f32.mrb[0].mxu0
    %v1487 = vpop.f32.mrb[0].mxu0
    %1488 = vdwg.mxu0
    %v1490 = vrot.slane %v1484, 2
    %v1492 = vadd.f32 %v1252, %v1490
    %v1493 = vtanh.pop %v1492
    %v1495 = vrot.slane %v1493, 6
    %v1497 = vadd.f32 %v1442, %v1495
    %v1498 = vpack.c.bf16 %v1493, %v1493
    %v1500 = vrot.slane %v1498, 3
    %v1502 = vsel %vm165, %v1500, 0
    %1504 = vmatprep.subr.bf16.mxu0 0
    %1505 = vmatpush1.bf16.msra.mxu0 %v1284
    %1506 = vmatprep.subr.bf16.mxu0 0
    %1507 = vmatpush1.bf16.msra.mxu0 %v1285
    %1508 = vmatprep.subr.bf16.mxu0 0
    %1509 = vmatpush1.bf16.msra.mxu0 %v1286
    %1510 = vmatprep.subr.bf16.mxu0 0
    %1511 = vmatpush1.bf16.msra.mxu0 %v1287
    %1512 = vmatprep.subr.bf16.mxu0 0
    %1513 = vmatpush1.bf16.msra.mxu0 0
    %1514 = vmatprep.subr.bf16.mxu0 0
    %1515 = vmatpush1.bf16.msra.mxu0 0
    %1516 = vmatprep.subr.bf16.mxu0 0
    %1517 = vmatpush1.bf16.msra.mxu0 0
    %1518 = vmatprep.subr.bf16.mxu0 0
    %1519 = vmatpush1.bf16.msra.mxu0 0
    %1520 = vmatprep.subr.bf16.mxu0 0
    %1521 = vmatpush1.bf16.msra.mxu0 0
    %1522 = vmatprep.subr.bf16.mxu0 0
    %1523 = vmatpush1.bf16.msra.mxu0 0
    %1524 = vmatprep.subr.bf16.mxu0 0
    %1525 = vmatpush1.bf16.msra.mxu0 0
    %1526 = vmatprep.subr.bf16.mxu0 0
    %1527 = vmatpush1.bf16.msra.mxu0 0
    %1528 = vmatprep.subr.bf16.mxu0 0
    %1529 = vmatpush1.bf16.msra.mxu0 0
    %1530 = vmatprep.subr.bf16.mxu0 0
    %1531 = vmatpush1.bf16.msra.mxu0 0
    %1532 = vmatprep.subr.bf16.mxu0 0
    %1533 = vmatpush1.bf16.msra.mxu0 0
    %1534 = vmatprep.subr.bf16.mxu0 0
    %1535 = vmatpush1.bf16.msra.mxu0 0
    %1536 = vmatprep.mubr.bf16.mxu0 0
    %1537 = vmatmul.mubr.bf16.gmra.mrb[0].mxu0 %v1502
    %v1538 = vpop.f32.mrb[0].mxu0
    %v1539 = vadd.f32 0.0, %v1538
    %v1540 = vpop.f32.mrb[0].mxu0
    %v1541 = vpop.f32.mrb[0].mxu0
    %v1542 = vpop.f32.mrb[0].mxu0
    %1543 = vdwg.mxu0
    %v1544 = vadd.f32 %v1256, %v1539
    %v1545 = vtanh.pop %v1544
    %v1546 = vadd.f32 %v1497, %v1545
    %v1547 = vpack.c.bf16 %v1545, %v1545
    %v1549 = vsel %vm165, %v1547, 0
    %1551 = vmatprep.subr.bf16.mxu0 0
    %1552 = vmatpush1.bf16.msra.mxu0 %v1284
    %1553 = vmatprep.subr.bf16.mxu0 0
    %1554 = vmatpush1.bf16.msra.mxu0 %v1285
    %1555 = vmatprep.subr.bf16.mxu0 0
    %1556 = vmatpush1.bf16.msra.mxu0 %v1286
    %1557 = vmatprep.subr.bf16.mxu0 0
    %1558 = vmatpush1.bf16.msra.mxu0 %v1287
    %1559 = vmatprep.subr.bf16.mxu0 0
    %1560 = vmatpush1.bf16.msra.mxu0 0
    %1561 = vmatprep.subr.bf16.mxu0 0
    %1562 = vmatpush1.bf16.msra.mxu0 0
    %1563 = vmatprep.subr.bf16.mxu0 0
    %1564 = vmatpush1.bf16.msra.mxu0 0
    %1565 = vmatprep.subr.bf16.mxu0 0
    %1566 = vmatpush1.bf16.msra.mxu0 0
    %1567 = vmatprep.subr.bf16.mxu0 0
    %1568 = vmatpush1.bf16.msra.mxu0 0
    %1569 = vmatprep.subr.bf16.mxu0 0
    %1570 = vmatpush1.bf16.msra.mxu0 0
    %1571 = vmatprep.subr.bf16.mxu0 0
    %1572 = vmatpush1.bf16.msra.mxu0 0
    %1573 = vmatprep.subr.bf16.mxu0 0
    %1574 = vmatpush1.bf16.msra.mxu0 0
    %1575 = vmatprep.subr.bf16.mxu0 0
    %1576 = vmatpush1.bf16.msra.mxu0 0
    %1577 = vmatprep.subr.bf16.mxu0 0
    %1578 = vmatpush1.bf16.msra.mxu0 0
    %1579 = vmatprep.subr.bf16.mxu0 0
    %1580 = vmatpush1.bf16.msra.mxu0 0
    %1581 = vmatprep.subr.bf16.mxu0 0
    %1582 = vmatpush1.bf16.msra.mxu0 0
    %1583 = vmatprep.mubr.bf16.mxu0 0
    %1584 = vmatmul.mubr.bf16.gmra.mrb[0].mxu0 %v1549
    %v1585 = vpop.f32.mrb[0].mxu0
    %v1586 = vadd.f32 0.0, %v1585
    %v1587 = vpop.f32.mrb[0].mxu0
    %v1588 = vpop.f32.mrb[0].mxu0
    %v1589 = vpop.f32.mrb[0].mxu0
    %1590 = vdwg.mxu0
    %v1592 = vrot.slane %v1586, 6
    %v1594 = vadd.f32 %v1259, %v1592
    %v1595 = vtanh.pop %v1594
    %v1597 = vrot.slane %v1595, 2
    %v1599 = vadd.f32 %v1546, %v1597
    %v1600 = vpack.c.bf16 %v1595, %v1595
    %v1602 = vrot.slane %v1600, 1
    %v1604 = vsel %vm165, %v1602, 0
    %1606 = vmatprep.subr.bf16.mxu0 0
    %1607 = vmatpush1.bf16.msra.mxu0 %v1284
    %1608 = vmatprep.subr.bf16.mxu0 0
    %1609 = vmatpush1.bf16.msra.mxu0 %v1285
    %1610 = vmatprep.subr.bf16.mxu0 0
    %1611 = vmatpush1.bf16.msra.mxu0 %v1286
    %1612 = vmatprep.subr.bf16.mxu0 0
    %1613 = vmatpush1.bf16.msra.mxu0 %v1287
    %1614 = vmatprep.subr.bf16.mxu0 0
    %1615 = vmatpush1.bf16.msra.mxu0 0
    %1616 = vmatprep.subr.bf16.mxu0 0
    %1617 = vmatpush1.bf16.msra.mxu0 0
    %1618 = vmatprep.subr.bf16.mxu0 0
    %1619 = vmatpush1.bf16.msra.mxu0 0
    %1620 = vmatprep.subr.bf16.mxu0 0
    %1621 = vmatpush1.bf16.msra.mxu0 0
    %1622 = vmatprep.subr.bf16.mxu0 0
    %1623 = vmatpush1.bf16.msra.mxu0 0
    %1624 = vmatprep.subr.bf16.mxu0 0
    %1625 = vmatpush1.bf16.msra.mxu0 0
    %1626 = vmatprep.subr.bf16.mxu0 0
    %1627 = vmatpush1.bf16.msra.mxu0 0
    %1628 = vmatprep.subr.bf16.mxu0 0
    %1629 = vmatpush1.bf16.msra.mxu0 0
    %1630 = vmatprep.subr.bf16.mxu0 0
    %1631 = vmatpush1.bf16.msra.mxu0 0
    %1632 = vmatprep.subr.bf16.mxu0 0
    %1633 = vmatpush1.bf16.msra.mxu0 0
    %1634 = vmatprep.subr.bf16.mxu0 0
    %1635 = vmatpush1.bf16.msra.mxu0 0
    %1636 = vmatprep.subr.bf16.mxu0 0
    %1637 = vmatpush1.bf16.msra.mxu0 0
    %1638 = vmatprep.mubr.bf16.mxu0 0
    %1639 = vmatmul.mubr.bf16.gmra.mrb[0].mxu0 %v1604
    %v1640 = vpop.f32.mrb[0].mxu0
    %v1641 = vadd.f32 0.0, %v1640
    %v1642 = vpop.f32.mrb[0].mxu0
    %v1643 = vpop.f32.mrb[0].mxu0
    %v1644 = vpop.f32.mrb[0].mxu0
    %1645 = vdwg.mxu0
    %v1647 = vrot.slane %v1641, 4
    %v1649 = vadd.f32 %v1256, %v1647
    %v1650 = vtanh.pop %v1649
    %v1652 = vrot.slane %v1650, 4
    %v1654 = vadd.f32 %v1599, %v1652
    %v1655 = vpack.c.bf16 %v1650, %v1650
    %v1657 = vrot.slane %v1655, 2
    %v1659 = vsel %vm165, %v1657, 0
    %1661 = vmatprep.subr.bf16.mxu0 0
    %1662 = vmatpush1.bf16.msra.mxu0 %v1284
    %1663 = vmatprep.subr.bf16.mxu0 0
    %1664 = vmatpush1.bf16.msra.mxu0 %v1285
    %1665 = vmatprep.subr.bf16.mxu0 0
    %1666 = vmatpush1.bf16.msra.mxu0 %v1286
    %1667 = vmatprep.subr.bf16.mxu0 0
    %1668 = vmatpush1.bf16.msra.mxu0 %v1287
    %1669 = vmatprep.subr.bf16.mxu0 0
    %1670 = vmatpush1.bf16.msra.mxu0 0
    %1671 = vmatprep.subr.bf16.mxu0 0
    %1672 = vmatpush1.bf16.msra.mxu0 0
    %1673 = vmatprep.subr.bf16.mxu0 0
    %1674 = vmatpush1.bf16.msra.mxu0 0
    %1675 = vmatprep.subr.bf16.mxu0 0
    %1676 = vmatpush1.bf16.msra.mxu0 0
    %1677 = vmatprep.subr.bf16.mxu0 0
    %1678 = vmatpush1.bf16.msra.mxu0 0
    %1679 = vmatprep.subr.bf16.mxu0 0
    %1680 = vmatpush1.bf16.msra.mxu0 0
    %1681 = vmatprep.subr.bf16.mxu0 0
    %1682 = vmatpush1.bf16.msra.mxu0 0
    %1683 = vmatprep.subr.bf16.mxu0 0
    %1684 = vmatpush1.bf16.msra.mxu0 0
    %1685 = vmatprep.subr.bf16.mxu0 0
    %1686 = vmatpush1.bf16.msra.mxu0 0
    %1687 = vmatprep.subr.bf16.mxu0 0
    %1688 = vmatpush1.bf16.msra.mxu0 0
    %1689 = vmatprep.subr.bf16.mxu0 0
    %1690 = vmatpush1.bf16.msra.mxu0 0
    %1691 = vmatprep.subr.bf16.mxu0 0
    %1692 = vmatpush1.bf16.msra.mxu0 0
    %1693 = vmatprep.mubr.bf16.mxu0 0
    %1694 = vmatmul.mubr.bf16.gmra.mrb[0].mxu0 %v1659
    %v1695 = vpop.f32.mrb[0].mxu0
    %v1696 = vadd.f32 0.0, %v1695
    %v1697 = vpop.f32.mrb[0].mxu0
    %v1698 = vpop.f32.mrb[0].mxu0
    %v1699 = vpop.f32.mrb[0].mxu0
    %1700 = vdwg.mxu0
    %v1702 = vrot.slane %v1696, 2
    %v1704 = vadd.f32 %v1259, %v1702
    %v1705 = vtanh.pop %v1704
    %v1707 = vrot.slane %v1705, 6
    %v1709 = vadd.f32 %v1654, %v1707
    %v1710 = vmul.f32 %v1709, 0.125
    %v1711 = vpack.c.bf16 %v1710, %v1710
    %v1712 = vld [vmem:[%s10] sm:$0xf]
    %v1713 = vld [vmem:[%s10 + $0x4] sm:$0xf]
    %v1714 = vld [vmem:[%s10 + $0x8] sm:$0xf]
    %v1715 = vld [vmem:[%s10 + $0xc] sm:$0xf]
    %v1716 = vld [vmem:[%s10 + $0x10] sm:$0xf]
    %v1717 = vld [vmem:[%s10 + $0x14] sm:$0xf]
    %v1718 = vld [vmem:[%s10 + $0x18] sm:$0xf]
    %v1719 = vld [vmem:[%s10 + $0x1c] sm:$0xf]
    %v1720 = vld [vmem:[%s11] sm:$0x1]
    %v1722 = vlaneseq
    %v1723 = vshrl.u32 %v1722, 7
    %v1724 = vsub.s32 0, %v1723
    %v1725 = vrot.slane %v1720, %v1724
    %v1735 = vunpack.c.l.b16 %v1712
    %v1736 = vunpack.c.l.b16 %v1713
    %v1737 = vunpack.c.l.b16 %v1714
    %v1738 = vunpack.c.l.b16 %v1715
    %v1739 = vunpack.c.l.b16 %v1716
    %v1740 = vunpack.c.l.b16 %v1717
    %v1741 = vunpack.c.l.b16 %v1718
    %v1742 = vunpack.c.l.b16 %v1719
    %v1743 = vpack.c.b16 %v1736, %v1735
    %v1744 = vpack.c.b16 %v1738, %v1737
    %v1745 = vpack.c.b16 %v1740, %v1739
    %v1746 = vpack.c.b16 %v1742, %v1741
    %v1752 = vsel %vm165, %v1711, 0
    %1754 = vmatprep.subr.bf16.mxu0 0
    %1755 = vmatpush1.bf16.msra.mxu0 %v1743
    %1756 = vmatprep.subr.bf16.mxu0 0
    %1757 = vmatpush1.bf16.msra.mxu0 %v1744
    %1758 = vmatprep.subr.bf16.mxu0 0
    %1759 = vmatpush1.bf16.msra.mxu0 %v1745
    %1760 = vmatprep.subr.bf16.mxu0 0
    %1761 = vmatpush1.bf16.msra.mxu0 %v1746
    %1762 = vmatprep.subr.bf16.mxu0 0
    %1763 = vmatpush1.bf16.msra.mxu0 0
    %1764 = vmatprep.subr.bf16.mxu0 0
    %1765 = vmatpush1.bf16.msra.mxu0 0
    %1766 = vmatprep.subr.bf16.mxu0 0
    %1767 = vmatpush1.bf16.msra.mxu0 0
    %1768 = vmatprep.subr.bf16.mxu0 0
    %1769 = vmatpush1.bf16.msra.mxu0 0
    %1770 = vmatprep.subr.bf16.mxu0 0
    %1771 = vmatpush1.bf16.msra.mxu0 0
    %1772 = vmatprep.subr.bf16.mxu0 0
    %1773 = vmatpush1.bf16.msra.mxu0 0
    %1774 = vmatprep.subr.bf16.mxu0 0
    %1775 = vmatpush1.bf16.msra.mxu0 0
    %1776 = vmatprep.subr.bf16.mxu0 0
    %1777 = vmatpush1.bf16.msra.mxu0 0
    %1778 = vmatprep.subr.bf16.mxu0 0
    %1779 = vmatpush1.bf16.msra.mxu0 0
    %1780 = vmatprep.subr.bf16.mxu0 0
    %1781 = vmatpush1.bf16.msra.mxu0 0
    %1782 = vmatprep.subr.bf16.mxu0 0
    %1783 = vmatpush1.bf16.msra.mxu0 0
    %1784 = vmatprep.subr.bf16.mxu0 0
    %1785 = vmatpush1.bf16.msra.mxu0 0
    %1786 = vmatprep.mubr.bf16.mxu0 0
    %1787 = vmatmul.mubr.bf16.gmra.mrb[0].mxu0 %v1752
    %v1788 = vpop.f32.mrb[0].mxu0
    %v1789 = vadd.f32 %v1725, %v1788
    %v1790 = vpop.f32.mrb[0].mxu0
    %v1791 = vpop.f32.mrb[0].mxu0
    %v1792 = vpop.f32.mrb[0].mxu0
    %1793 = vdwg.mxu0
    %vm1794 = vcmask 25600
    %v1795 = vsel %vm1794, %v1789, -inf
    %1796 = vmax.xlane.f32.xlu0 %v1795
    %v1797 = vpop.xlane.xlu0 %1796
    %v1798 = vsub.f32 %v1789, %v1797
    %v1799 = vmul.f32 %v1798, 1.442695
    %v1800 = vpow.pop %v1799
    %v1801 = vsel %vm1794, %v1800, 0.0
    %1802 = vadd.xlane.f32.xlu0 %v1801
    %v1803 = vpop.xlane.xlu0 %1802
    %v1804 = vrcp.pop %v1803
    %v1805 = vmul.f32 %v1800, %v1804
    %1806 = vst.msk [vmem:[#allocation2] sm:$0x3] %vm1794, %v1805
    // Predicated region
    $region50: #{rnn_forward.1} parent=1 // pred_check
      _
    $region51: #{rnn_forward.1} parent=1 // pred_check_branch
      %1808 = sbr.rel (0) target = $region53
    $region52: #{rnn_forward.1} parent=1 // pred_region
      %s1810 = ssub.s32 32, 32
      %1811 = vsyncadd [#allocation3], %s1810
      %s1813 = sshll.u32 [#allocation2], 4
      %s1814 = int_to_ptr.vmem [resolvable:$true] %s1813
      %1816 = dma.vmem_to_hbm [thread:$0]  %s1814, 32, %s12, [#allocation3]
    $region53: #{rnn_forward.1} parent=1 // pred_fallthru
      _
    // Predicated region
    $region54: #{rnn_forward.1} parent=1 // pred_check
      _
    $region55: #{rnn_forward.1} parent=1 // pred_check_branch
      %1818 = sbr.rel (0) target = $region57
    $region56: #{rnn_forward.1} parent=1 // pred_region
      %1819 = dma.done [#allocation3], 32
    $region57: #{rnn_forward.1} parent=1 // pred_fallthru
      _
    %1820 = vsyncpa [#allocation3], 1

</llo_original>
